<compile_context>
chip_gen: v7x
topology: tpu7x:2x2x1
jax: 0.10.0
libtpu: 0.0.40
codegen_flags: <defaults>
</compile_context>

<pallas_src>
import functools

import jax
import jax.numpy as jnp
from jax.experimental import pallas as pl
from jax.experimental.pallas import tpu as pltpu

NEG_SLOPE = 0.2
HID = 512
OUT_PAD = 128   # lane-dense padded head width (real head width is 1)
EMB_PAD = 128   # padded lane width for the embedding rows of W1


def _round_up(x, m):
    return (x + m - 1) // m * m


def _leaky_relu(h):
    # slope < 1  =>  leaky_relu(h) == max(h, slope * h)
    return jnp.maximum(h, NEG_SLOPE * h)


def _random_bits(shape, salt):
    """Counter-based uniform uint32 bits from plain jnp ops (TPU + interpret)."""
    r = jax.lax.broadcasted_iota(jnp.int32, shape, 0).astype(jnp.uint32)
    c = jax.lax.broadcasted_iota(jnp.int32, shape, 1).astype(jnp.uint32)
    x = r * jnp.uint32(0x9E3779B1) + c * jnp.uint32(0x85EBCA77) + salt
    # murmur3-style finalizer
    x = x ^ (x >> 16)
    x = x * jnp.uint32(0x7FEB352D)
    x = x ^ (x >> 15)
    x = x * jnp.uint32(0x846CA68B)
    x = x ^ (x >> 16)
    return x


def _dropout(h, p, salt):
    """Inverted dropout; `p` is a static Python float."""
    if p <= 0.0:
        return h
    if p >= 1.0:
        return jnp.zeros_like(h)
    bits = _random_bits(h.shape, salt)
    threshold = jnp.uint32(int(p * 4294967296.0))   # P(bits >= thr) = 1 - p
    scale = 1.0 / (1.0 - p)
    return jnp.where(bits >= threshold, h * scale, jnp.zeros_like(h))


def discriminator_kernel(
    seed_ref,                        # scalar-prefetch: (1,) int32 in SMEM
    x_ref,                           # (B_TILE, D_IMG)   bf16
    e_ref,                           # (B_TILE, EMB_PAD) bf16
    w1x_ref, w1e_ref, b1_ref,
    w2_ref, b2_ref,
    w3_ref, b3_ref,
    w4_ref, b4_ref,
    o_ref,                           # (B_TILE, OUT_PAD) bf16
    *, training, dropout_p,
):
    # Layer 1: fused  x @ W1_img + emb @ W1_emb + b1  (f32 MXU accumulation).
    h = jnp.dot(x_ref[...], w1x_ref[...], preferred_element_type=jnp.float32)
    h = h + jnp.dot(e_ref[...], w1e_ref[...], preferred_element_type=jnp.float32)
    h = h + b1_ref[...]
    h = _leaky_relu(h)

    if training:
        # Per-tile salt: seed + program_id (both non-negative, exact cast).
        tile_salt = (seed_ref[0] + pl.program_id(0) * 131071).astype(jnp.uint32)

    # Layer 2: Linear + LeakyReLU + Dropout
    h = jnp.dot(h.astype(jnp.bfloat16), w2_ref[...],
                preferred_element_type=jnp.float32) + b2_ref[...]
    h = _leaky_relu(h)
    if training:
        h = _dropout(h, dropout_p, tile_salt ^ jnp.uint32(0x11111111))

    # Layer 3: Linear + LeakyReLU + Dropout
    h = jnp.dot(h.astype(jnp.bfloat16), w3_ref[...],
                preferred_element_type=jnp.float32) + b3_ref[...]
    h = _leaky_relu(h)
    if training:
        h = _dropout(h, dropout_p, tile_salt ^ jnp.uint32(0x22222222))

    # Layer 4: Linear (head padded to 128 lanes) + Sigmoid, lane-dense bf16 store.
    h = jnp.dot(h.astype(jnp.bfloat16), w4_ref[...],
                preferred_element_type=jnp.float32) + b4_ref[...]
    o_ref[...] = jax.nn.sigmoid(h).astype(o_ref.dtype)


def make_params(key, image_size, channels, num_classes):
    """Deterministic synthetic params matching PyTorch init shapes/scales.

    Linear weights are stored pre-transposed to (in, out), W1 is split into an
    image part and a (lane-padded) embedding part, everything is cast to bf16
    once; biases stay f32 (added to the f32 accumulator).
    """
    d_img = channels * image_size * image_size
    in_features = d_img + num_classes

    keys = jax.random.split(key, 5)
    params = {
        # nn.Embedding default init: N(0, 1).
        "emb": jax.random.normal(keys[0], (num_classes, num_classes), jnp.float32),
    }

    # Layer 1 (split into image / embedding rows).
    std1 = (2.0 / in_features) ** 0.5 * 0.1          # kaiming_normal_ * 0.1
    w1 = jax.random.normal(keys[1], (in_features, HID), jnp.float32) * std1
    params["w1_img"] = w1[:d_img].astype(jnp.bfloat16)
    w1e = jnp.zeros((EMB_PAD, HID), jnp.float32).at[:num_classes].set(w1[d_img:])
    params["w1_emb"] = w1e.astype(jnp.bfloat16)
    params["b1"] = jnp.zeros((1, HID), jnp.float32)

    # Layers 2..4.
    dims = [(HID, HID), (HID, HID), (HID, 1)]
    for i, (fi, fo) in enumerate(dims, start=2):
        std = (2.0 / fi) ** 0.5 * 0.1
        fop = OUT_PAD if fo == 1 else fo
        w = jax.random.normal(keys[i + 1], (fi, fo), jnp.float32) * std
        wp = jnp.zeros((fi, fop), jnp.float32).at[:, :fo].set(w)
        params[f"w{i}"] = wp.astype(jnp.bfloat16)
        params[f"b{i}"] = jnp.zeros((1, fop), jnp.float32)
    return params


def _pick_tile(batch):
    """Generation-aware batch tile heuristic."""
    if batch <= 128:
        return max(8, _round_up(batch, 8))   # single step, no wasted rows
    if batch <= 256:
        return 128                           # grid >= 2 -> both v7x TCs
    pad128 = _round_up(batch, 128) - batch
    pad256 = _round_up(batch, 256) - batch
    # Prefer the larger tile (amortizes per-step overhead on single-TC
    # v5e/v6e) unless the smaller tile strictly reduces padded rows.
    return 128 if pad128 < pad256 else 256


@functools.partial(jax.jit, static_argnames=("training", "dropout_p"))
def discriminator_forward(x, labels, params, seed, *, training=False, dropout_p=0.5):
    batch = x.shape[0]

    # Cheap glue in plain JAX (one fused pad+cast per operand, no concat).
    x_flat = x.reshape(batch, -1)
    d_img = x_flat.shape[1]
    emb = params["emb"][labels.reshape(-1)]            # (batch, num_classes)
    nc = emb.shape[1]

    b_tile = _pick_tile(batch)
    b_pad = _round_up(batch, b_tile)

    x_in = jnp.pad(x_flat.astype(jnp.bfloat16), ((0, b_pad - batch), (0, 0)))
    e_in = jnp.pad(emb.astype(jnp.bfloat16),
                   ((0, b_pad - batch), (0, EMB_PAD - nc)))

    weight_args = [
        params["w1_img"], params["w1_emb"], params["b1"],
        params["w2"], params["b2"],
        params["w3"], params["b3"],
        params["w4"], params["b4"],
    ]

    def x_map(i, seed_ref):
        return (i, 0)

    def const_map(i, seed_ref):             # weights resident across batch tiles
        return (0, 0)

    in_specs = [
        pl.BlockSpec((b_tile, d_img), x_map),
        pl.BlockSpec((b_tile, EMB_PAD), x_map),
    ] + [pl.BlockSpec(w.shape, const_map) for w in weight_args]

    out_specs = pl.BlockSpec((b_tile, OUT_PAD), x_map)

    # Advisory cost hint so XLA schedules the surrounding glue sensibly.
    flops = 2 * b_pad * (d_img * HID + EMB_PAD * HID + 2 * HID * HID + HID * OUT_PAD)
    weight_bytes = sum(int(w.size) * w.dtype.itemsize for w in weight_args)
    bytes_accessed = (int(x_in.size) * 2 + int(e_in.size) * 2
                      + weight_bytes + b_pad * OUT_PAD * 2)
    cost = pl.CostEstimate(flops=flops, transcendentals=b_pad * OUT_PAD,
                           bytes_accessed=bytes_accessed)

    # Footprint-derived VMEM limit (pipelined activations + resident weights).
    act_bytes = (b_tile * (d_img + EMB_PAD) * 2          # bf16 inputs
                 + b_tile * OUT_PAD * 2                  # bf16 output
                 + 4 * b_tile * HID * 4)                 # f32 intermediates
    vmem_limit = 2 * (weight_bytes + act_bytes) + (8 << 20)

    kernel = functools.partial(
        discriminator_kernel, training=training, dropout_p=dropout_p)

    out = pl.pallas_call(
        kernel,
        out_shape=jax.ShapeDtypeStruct((b_pad, OUT_PAD), jnp.bfloat16),
        grid_spec=pltpu.PrefetchScalarGridSpec(
            num_scalar_prefetch=1,
            grid=(b_pad // b_tile,),
            in_specs=in_specs,
            out_specs=out_specs,
        ),
        compiler_params=pltpu.CompilerParams(
            dimension_semantics=("parallel",),
            vmem_limit_bytes=int(vmem_limit),
        ),
        cost_estimate=cost,
    )(seed, x_in, e_in, *weight_args)

    return out[:batch, :1].astype(jnp.float32)


def reference_forward(x, labels, params, num_classes):
    """Pure-JAX f32 eval-mode reference (dropout = identity)."""
    b = x.shape[0]
    xf = x.reshape(b, -1)
    emb = params["emb"][labels.reshape(-1)]
    inp = jnp.concatenate([xf, emb], axis=-1)

    w1 = jnp.concatenate(
        [params["w1_img"].astype(jnp.float32),
         params["w1_emb"].astype(jnp.float32)[:num_classes]], axis=0)
    h = _leaky_relu(inp @ w1 + params["b1"])
    h = _leaky_relu(h @ params["w2"].astype(jnp.float32) + params["b2"])
    h = _leaky_relu(h @ params["w3"].astype(jnp.float32) + params["b3"])
    h = h @ params["w4"].astype(jnp.float32)[:, :1] + params["b4"][:, :1]
    return jax.nn.sigmoid(h)


if __name__ == "__main__":
    # Small shapes consistent with the module's forward.
    batch = 8
    image_size = 16
    channels = 1
    num_classes = 2

    key = jax.random.PRNGKey(0)
    k_param, k_x, k_lbl = jax.random.split(key, 3)

    params = make_params(k_param, image_size, channels, num_classes)
    x = jax.random.normal(k_x, (batch, channels, image_size, image_size), jnp.float32)
    labels = jax.random.randint(k_lbl, (batch,), 0, num_classes, jnp.int32)
    seed = jnp.array([42], jnp.int32)

    # Eval mode (dropout = identity): deterministic, checked vs f32 reference.
    out_eval = discriminator_forward(x, labels, params, seed, training=False)
    out_eval = jax.block_until_ready(out_eval)
    assert out_eval.shape == (batch, 1), out_eval.shape
    assert jnp.all(jnp.isfinite(out_eval)), "non-finite output"
    assert jnp.all((out_eval > 0.0) & (out_eval < 1.0)), "sigmoid range violated"

    ref = reference_forward(x, labels, params, num_classes)
    max_err = float(jnp.max(jnp.abs(out_eval - ref)))
    assert max_err < 5e-2, f"mismatch vs reference: {max_err}"

    # Training mode (dropout active, matches nn.Module default .train() state).
    # TODO(synk): dropout uses an in-kernel counter-based hash PRNG, not
    # PyTorch's RNG stream (identical distribution, different sample).
    out_train = discriminator_forward(x, labels, params, seed, training=True)
    out_train = jax.block_until_ready(out_train)
    assert out_train.shape == (batch, 1), out_train.shape
    assert jnp.all(jnp.isfinite(out_train)), "non-finite training output"

    print("KERNEL_OK")
</pallas_src>

<mosaic_0001>
module attributes {stable_mosaic.version = 11 : i64} {
  func.func @discriminator_kernel(%arg0: i32, %arg1: memref<1xi32, #tpu.memory_space<smem>>, %arg2: memref<8x256xbf16, #tpu.memory_space<vmem>>, %arg3: memref<8x128xbf16, #tpu.memory_space<vmem>>, %arg4: memref<256x512xbf16, #tpu.memory_space<vmem>>, %arg5: memref<128x512xbf16, #tpu.memory_space<vmem>>, %arg6: memref<1x512xf32, #tpu.memory_space<vmem>>, %arg7: memref<512x512xbf16, #tpu.memory_space<vmem>>, %arg8: memref<1x512xf32, #tpu.memory_space<vmem>>, %arg9: memref<512x512xbf16, #tpu.memory_space<vmem>>, %arg10: memref<1x512xf32, #tpu.memory_space<vmem>>, %arg11: memref<512x128xbf16, #tpu.memory_space<vmem>>, %arg12: memref<1x128xf32, #tpu.memory_space<vmem>>, %arg13: memref<8x128xbf16, #tpu.memory_space<vmem>>) attributes {dimension_semantics = [#tpu.dimension_semantics<parallel>], iteration_bounds = array<i64: 1>, scalar_prefetch = 1 : i64, scratch_operands = 0 : i64, tpu.core_type = #tpu.core_type<tc>, window_params = [{transform_indices = @transform_0, window_bounds = array<i64: 8, 256>}, {transform_indices = @transform_1, window_bounds = array<i64: 8, 128>}, {pipeline_mode = #tpu.pipeline_mode<synchronous>, transform_indices = @transform_2, window_bounds = array<i64: 256, 512>}, {pipeline_mode = #tpu.pipeline_mode<synchronous>, transform_indices = @transform_3, window_bounds = array<i64: 128, 512>}, {pipeline_mode = #tpu.pipeline_mode<synchronous>, transform_indices = @transform_4, window_bounds = array<i64: 1, 512>}, {pipeline_mode = #tpu.pipeline_mode<synchronous>, transform_indices = @transform_5, window_bounds = array<i64: 512, 512>}, {pipeline_mode = #tpu.pipeline_mode<synchronous>, transform_indices = @transform_6, window_bounds = array<i64: 1, 512>}, {pipeline_mode = #tpu.pipeline_mode<synchronous>, transform_indices = @transform_7, window_bounds = array<i64: 512, 512>}, {pipeline_mode = #tpu.pipeline_mode<synchronous>, transform_indices = @transform_8, window_bounds = array<i64: 1, 512>}, {pipeline_mode = #tpu.pipeline_mode<synchronous>, transform_indices = @transform_9, window_bounds = array<i64: 512, 128>}, {pipeline_mode = #tpu.pipeline_mode<synchronous>, transform_indices = @transform_10, window_bounds = array<i64: 1, 128>}, {transform_indices = @transform_11, window_bounds = array<i64: 8, 128>}]} {
    %c0 = arith.constant 0 : index
    %c0_0 = arith.constant 0 : index
    %0 = vector.load %arg2[%c0, %c0_0] : memref<8x256xbf16, #tpu.memory_space<vmem>>, vector<8x256xbf16>
    %c0_1 = arith.constant 0 : index
    %c0_2 = arith.constant 0 : index
    %1 = vector.load %arg4[%c0_1, %c0_2] : memref<256x512xbf16, #tpu.memory_space<vmem>>, vector<256x512xbf16>
    %cst = arith.constant dense<0.000000e+00> : vector<8x512xf32>
    %2 = tpu.matmul %0, %1, %cst {dimension_numbers = #tpu.dot_dimension_numbers<[1], [0], [0], [1], [0, 0, 1, 1], [], []>} : vector<8x256xbf16>, vector<256x512xbf16>, vector<8x512xf32> -> vector<8x512xf32>
    %c0_3 = arith.constant 0 : index
    %c0_4 = arith.constant 0 : index
    %3 = vector.load %arg3[%c0_3, %c0_4] : memref<8x128xbf16, #tpu.memory_space<vmem>>, vector<8x128xbf16>
    %c0_5 = arith.constant 0 : index
    %c0_6 = arith.constant 0 : index
    %4 = vector.load %arg5[%c0_5, %c0_6] : memref<128x512xbf16, #tpu.memory_space<vmem>>, vector<128x512xbf16>
    %cst_7 = arith.constant dense<0.000000e+00> : vector<8x512xf32>
    %5 = tpu.matmul %3, %4, %cst_7 {dimension_numbers = #tpu.dot_dimension_numbers<[1], [0], [0], [1], [0, 0, 1, 1], [], []>} : vector<8x128xbf16>, vector<128x512xbf16>, vector<8x512xf32> -> vector<8x512xf32>
    %6 = arith.addf %2, %5 : vector<8x512xf32>
    %c0_8 = arith.constant 0 : index
    %c0_9 = arith.constant 0 : index
    %7 = vector.load %arg6[%c0_8, %c0_9] : memref<1x512xf32, #tpu.memory_space<vmem>>, vector<1x512xf32>
    %8 = vector.broadcast %7 : vector<1x512xf32> to vector<8x512xf32>
    %9 = arith.addf %6, %8 : vector<8x512xf32>
    %cst_10 = arith.constant 2.000000e-01 : f32
    %10 = vector.broadcast %cst_10 : f32 to vector<8x512xf32>
    %11 = arith.mulf %10, %9 : vector<8x512xf32>
    %12 = arith.maximumf %9, %11 : vector<8x512xf32>
    %13 = arith.truncf %12 : vector<8x512xf32> to vector<8x512xbf16>
    %c0_11 = arith.constant 0 : index
    %c0_12 = arith.constant 0 : index
    %14 = vector.load %arg7[%c0_11, %c0_12] : memref<512x512xbf16, #tpu.memory_space<vmem>>, vector<512x512xbf16>
    %cst_13 = arith.constant dense<0.000000e+00> : vector<8x512xf32>
    %15 = tpu.matmul %13, %14, %cst_13 {dimension_numbers = #tpu.dot_dimension_numbers<[1], [0], [0], [1], [0, 0, 1, 1], [], []>} : vector<8x512xbf16>, vector<512x512xbf16>, vector<8x512xf32> -> vector<8x512xf32>
    %c0_14 = arith.constant 0 : index
    %c0_15 = arith.constant 0 : index
    %16 = vector.load %arg8[%c0_14, %c0_15] : memref<1x512xf32, #tpu.memory_space<vmem>>, vector<1x512xf32>
    %17 = vector.broadcast %16 : vector<1x512xf32> to vector<8x512xf32>
    %18 = arith.addf %15, %17 : vector<8x512xf32>
    %cst_16 = arith.constant 2.000000e-01 : f32
    %19 = vector.broadcast %cst_16 : f32 to vector<8x512xf32>
    %20 = arith.mulf %19, %18 : vector<8x512xf32>
    %21 = arith.maximumf %18, %20 : vector<8x512xf32>
    %22 = arith.truncf %21 : vector<8x512xf32> to vector<8x512xbf16>
    %c0_17 = arith.constant 0 : index
    %c0_18 = arith.constant 0 : index
    %23 = vector.load %arg9[%c0_17, %c0_18] : memref<512x512xbf16, #tpu.memory_space<vmem>>, vector<512x512xbf16>
    %cst_19 = arith.constant dense<0.000000e+00> : vector<8x512xf32>
    %24 = tpu.matmul %22, %23, %cst_19 {dimension_numbers = #tpu.dot_dimension_numbers<[1], [0], [0], [1], [0, 0, 1, 1], [], []>} : vector<8x512xbf16>, vector<512x512xbf16>, vector<8x512xf32> -> vector<8x512xf32>
    %c0_20 = arith.constant 0 : index
    %c0_21 = arith.constant 0 : index
    %25 = vector.load %arg10[%c0_20, %c0_21] : memref<1x512xf32, #tpu.memory_space<vmem>>, vector<1x512xf32>
    %26 = vector.broadcast %25 : vector<1x512xf32> to vector<8x512xf32>
    %27 = arith.addf %24, %26 : vector<8x512xf32>
    %cst_22 = arith.constant 2.000000e-01 : f32
    %28 = vector.broadcast %cst_22 : f32 to vector<8x512xf32>
    %29 = arith.mulf %28, %27 : vector<8x512xf32>
    %30 = arith.maximumf %27, %29 : vector<8x512xf32>
    %31 = arith.truncf %30 : vector<8x512xf32> to vector<8x512xbf16>
    %c0_23 = arith.constant 0 : index
    %c0_24 = arith.constant 0 : index
    %32 = vector.load %arg11[%c0_23, %c0_24] : memref<512x128xbf16, #tpu.memory_space<vmem>>, vector<512x128xbf16>
    %cst_25 = arith.constant dense<0.000000e+00> : vector<8x128xf32>
    %33 = tpu.matmul %31, %32, %cst_25 {dimension_numbers = #tpu.dot_dimension_numbers<[1], [0], [0], [1], [0, 0, 1, 1], [], []>} : vector<8x512xbf16>, vector<512x128xbf16>, vector<8x128xf32> -> vector<8x128xf32>
    %c0_26 = arith.constant 0 : index
    %c0_27 = arith.constant 0 : index
    %34 = vector.load %arg12[%c0_26, %c0_27] : memref<1x128xf32, #tpu.memory_space<vmem>>, vector<1x128xf32>
    %35 = vector.broadcast %34 : vector<1x128xf32> to vector<8x128xf32>
    %36 = arith.addf %33, %35 : vector<8x128xf32>
    %37 = arith.negf %36 : vector<8x128xf32>
    %38 = math.exp %37 : vector<8x128xf32>
    %cst_28 = arith.constant 1.000000e+00 : f32
    %39 = vector.broadcast %cst_28 : f32 to vector<8x128xf32>
    %40 = arith.addf %39, %38 : vector<8x128xf32>
    %41 = arith.divf %39, %40 : vector<8x128xf32>
    %42 = arith.truncf %41 : vector<8x128xf32> to vector<8x128xbf16>
    %c0_29 = arith.constant 0 : index
    %c0_30 = arith.constant 0 : index
    %43 = vector.load %arg13[%c0_29, %c0_30] : memref<8x128xbf16, #tpu.memory_space<vmem>>, vector<8x128xbf16>
    tpu.vector_store %arg13[%c0_29, %c0_30], %42 {strides = array<i32>} : memref<8x128xbf16, #tpu.memory_space<vmem>>, vector<8x128xbf16>,
    return
  }
  func.func @transform_0(%arg0: i32, %arg1: memref<1xi32, #tpu.memory_space<smem>>) -> (i32, i32) {
    %c0_i32 = arith.constant 0 : i32
    %c0_i32_0 = arith.constant 0 : i32
    return %arg0, %c0_i32 : i32, i32
  }
  func.func @transform_1(%arg0: i32, %arg1: memref<1xi32, #tpu.memory_space<smem>>) -> (i32, i32) {
    %c0_i32 = arith.constant 0 : i32
    %c0_i32_0 = arith.constant 0 : i32
    return %arg0, %c0_i32 : i32, i32
  }
  func.func @transform_2(%arg0: i32, %arg1: memref<1xi32, #tpu.memory_space<smem>>) -> (i32, i32) {
    %c0_i32 = arith.constant 0 : i32
    %c0_i32_0 = arith.constant 0 : i32
    %c0_i32_1 = arith.constant 0 : i32
    return %c0_i32, %c0_i32_0 : i32, i32
  }
  func.func @transform_3(%arg0: i32, %arg1: memref<1xi32, #tpu.memory_space<smem>>) -> (i32, i32) {
    %c0_i32 = arith.constant 0 : i32
    %c0_i32_0 = arith.constant 0 : i32
    %c0_i32_1 = arith.constant 0 : i32
    return %c0_i32, %c0_i32_0 : i32, i32
  }
  func.func @transform_4(%arg0: i32, %arg1: memref<1xi32, #tpu.memory_space<smem>>) -> (i32, i32) {
    %c0_i32 = arith.constant 0 : i32
    %c0_i32_0 = arith.constant 0 : i32
    %c0_i32_1 = arith.constant 0 : i32
    return %c0_i32, %c0_i32_0 : i32, i32
  }
  func.func @transform_5(%arg0: i32, %arg1: memref<1xi32, #tpu.memory_space<smem>>) -> (i32, i32) {
    %c0_i32 = arith.constant 0 : i32
    %c0_i32_0 = arith.constant 0 : i32
    %c0_i32_1 = arith.constant 0 : i32
    return %c0_i32, %c0_i32_0 : i32, i32
  }
  func.func @transform_6(%arg0: i32, %arg1: memref<1xi32, #tpu.memory_space<smem>>) -> (i32, i32) {
    %c0_i32 = arith.constant 0 : i32
    %c0_i32_0 = arith.constant 0 : i32
    %c0_i32_1 = arith.constant 0 : i32
    return %c0_i32, %c0_i32_0 : i32, i32
  }
  func.func @transform_7(%arg0: i32, %arg1: memref<1xi32, #tpu.memory_space<smem>>) -> (i32, i32) {
    %c0_i32 = arith.constant 0 : i32
    %c0_i32_0 = arith.constant 0 : i32
    %c0_i32_1 = arith.constant 0 : i32
    return %c0_i32, %c0_i32_0 : i32, i32
  }
  func.func @transform_8(%arg0: i32, %arg1: memref<1xi32, #tpu.memory_space<smem>>) -> (i32, i32) {
    %c0_i32 = arith.constant 0 : i32
    %c0_i32_0 = arith.constant 0 : i32
    %c0_i32_1 = arith.constant 0 : i32
    return %c0_i32, %c0_i32_0 : i32, i32
  }
  func.func @transform_9(%arg0: i32, %arg1: memref<1xi32, #tpu.memory_space<smem>>) -> (i32, i32) {
    %c0_i32 = arith.constant 0 : i32
    %c0_i32_0 = arith.constant 0 : i32
    %c0_i32_1 = arith.constant 0 : i32
    return %c0_i32, %c0_i32_0 : i32, i32
  }
  func.func @transform_10(%arg0: i32, %arg1: memref<1xi32, #tpu.memory_space<smem>>) -> (i32, i32) {
    %c0_i32 = arith.constant 0 : i32
    %c0_i32_0 = arith.constant 0 : i32
    %c0_i32_1 = arith.constant 0 : i32
    return %c0_i32, %c0_i32_0 : i32, i32
  }
  func.func @transform_11(%arg0: i32, %arg1: memref<1xi32, #tpu.memory_space<smem>>) -> (i32, i32) {
    %c0_i32 = arith.constant 0 : i32
    %c0_i32_0 = arith.constant 0 : i32
    return %arg0, %c0_i32 : i32, i32
  }
}

</mosaic_0001>

<llo_original>
// kernel: discriminator_forward.1
$region0: #{discriminator_forward.1}
  #allocation0 [shape = 'u32[]', space=smem, size = 0x4, offset = 0x4, fixed_abs, tag = 'smem constant byte address 0x4 - core index']
  #allocation1 [shape = 'u32[144,128]{1,0:T(1,128)}', space=vmem, size = 0x12000, scoped, tag = 'internal scratch']
  #allocation2 [shape = 's32[1]{0}', space=sflag, size = 0x4, scoped, tag = 'scoped memory for discriminator_forward.1']
  #allocation3 [shape = 's32[1]{0:T(128)S(6)}', space=smem, size = 0x200, scoped, tag = 'prefetched SMEM operand 0']
  %s0 = inlined_call_operand.<no memory space> [shape: s32[1], index: 0, kind: input, shape index: {}]
  %s1 = inlined_call_operand.vmem [shape: bf16[8,256], index: 1, kind: input, shape index: {}]
  %s2 = inlined_call_operand.vmem [shape: bf16[8,128], index: 2, kind: input, shape index: {}]
  %s3 = inlined_call_operand.hbm [shape: bf16[256,512], index: 3, kind: input, shape index: {}]
  %s4 = inlined_call_operand.vmem [shape: bf16[128,512], index: 4, kind: input, shape index: {}]
  %s5 = inlined_call_operand.vmem [shape: f32[1,512], index: 5, kind: input, shape index: {}]
  %s6 = inlined_call_operand.hbm [shape: bf16[512,512], index: 6, kind: input, shape index: {}]
  %s7 = inlined_call_operand.vmem [shape: f32[1,512], index: 7, kind: input, shape index: {}]
  %s8 = inlined_call_operand.hbm [shape: bf16[512,512], index: 8, kind: input, shape index: {}]
  %s9 = inlined_call_operand.vmem [shape: f32[1,512], index: 9, kind: input, shape index: {}]
  %s10 = inlined_call_operand.hbm [shape: bf16[512,128], index: 10, kind: input, shape index: {}]
  %s11 = inlined_call_operand.vmem [shape: f32[1,128], index: 11, kind: input, shape index: {}]
  %s12 = inlined_call_operand.vmem [shape: bf16[8,128], index: 12, kind: output, shape index: {}]
  %s13 = sld [smem:[#allocation0]]
  $region70: #{discriminator_forward.1} parent=0
    _
  %s15 = ssub.s32 1, %s13
  %s16 = scalar_select 0, %s15, %s13
  %17 = sst [smem:[#allocation3]] %s0
  $region1: #{discriminator_forward.1} parent=0
    #allocation4 [shape = 'u8[262144]{0}', space=vmem, size = 0x40000, scoped, tag = 'input window, operand 3, single buffered']
    #allocation5 [shape = 's32[1]{0}', space=sflag, size = 0x4, scoped, tag = 'scoped memory for discriminator_forward.1']
    #allocation6 [shape = 'u8[524288]{0}', space=vmem, size = 0x80000, scoped, tag = 'input window, operand 6, single buffered']
    #allocation7 [shape = 's32[1]{0}', space=sflag, size = 0x4, scoped, tag = 'scoped memory for discriminator_forward.1']
    #allocation8 [shape = 'u8[524288]{0}', space=vmem, size = 0x80000, scoped, tag = 'input window, operand 8, single buffered']
    #allocation9 [shape = 'u8[131072]{0}', space=vmem, size = 0x20000, scoped, tag = 'input window, operand 10, single buffered']
    #allocation10 [shape = 's32[1]{0}', space=sflag, size = 0x4, scoped, tag = 'scoped memory for discriminator_forward.1']
    %18 = vsyncpa [#allocation5], 0
    %19 = vsyncpa [#allocation7], 0
    %20 = vsyncpa [#allocation10], 0
    // Predicated region
    $region2: #{discriminator_forward.1} parent=1 // pred_check
      _
    $region3: #{discriminator_forward.1} parent=1 // pred_check_branch
      %22 = sbr.rel (0) target = $region5
    $region4: #{discriminator_forward.1} parent=1 // pred_region
      _
    $region5: #{discriminator_forward.1} parent=1 // pred_fallthru
      _
    // Predicated region
    $region6: #{discriminator_forward.1} parent=1 // pred_check
      _
    $region7: #{discriminator_forward.1} parent=1 // pred_check_branch
      %24 = sbr.rel (0) target = $region9
    $region8: #{discriminator_forward.1} parent=1 // pred_region
      _
    $region9: #{discriminator_forward.1} parent=1 // pred_fallthru
      _
    // Predicated region
    $region10: #{discriminator_forward.1} parent=1 // pred_check
      _
    $region11: #{discriminator_forward.1} parent=1 // pred_check_branch
      %26 = sbr.rel (0) target = $region13
    $region12: #{discriminator_forward.1} parent=1 // pred_region
      %s28 = ssub.s32 8192, 8192
      %29 = vsyncadd [#allocation5], %s28
      %s30 = sshll.u32 [#allocation4], 4
      %s31 = int_to_ptr.vmem [resolvable:$true] %s30
      %36 = dma.hbm_to_vmem [thread:$0]  %s3, 8192, %s31, [#allocation5], 256, 256, 16
    $region13: #{discriminator_forward.1} parent=1 // pred_fallthru
      _
    // Predicated region
    $region14: #{discriminator_forward.1} parent=1 // pred_check
      _
    $region15: #{discriminator_forward.1} parent=1 // pred_check_branch
      %38 = sbr.rel (0) target = $region17
    $region16: #{discriminator_forward.1} parent=1 // pred_region
      _
    $region17: #{discriminator_forward.1} parent=1 // pred_fallthru
      _
    // Predicated region
    $region18: #{discriminator_forward.1} parent=1 // pred_check
      _
    $region19: #{discriminator_forward.1} parent=1 // pred_check_branch
      %40 = sbr.rel (0) target = $region21
    $region20: #{discriminator_forward.1} parent=1 // pred_region
      _
    $region21: #{discriminator_forward.1} parent=1 // pred_fallthru
      _
    // Predicated region
    $region22: #{discriminator_forward.1} parent=1 // pred_check
      _
    $region23: #{discriminator_forward.1} parent=1 // pred_check_branch
      %42 = sbr.rel (0) target = $region25
    $region24: #{discriminator_forward.1} parent=1 // pred_region
      %s44 = ssub.s32 16384, 16384
      %45 = vsyncadd [#allocation7], %s44
      %s46 = sshll.u32 [#allocation6], 4
      %s47 = int_to_ptr.vmem [resolvable:$true] %s46
      %52 = dma.hbm_to_vmem [thread:$0]  %s6, 16384, %s47, [#allocation7], 256, 256, 16
    $region25: #{discriminator_forward.1} parent=1 // pred_fallthru
      _
    // Predicated region
    $region26: #{discriminator_forward.1} parent=1 // pred_check
      _
    $region27: #{discriminator_forward.1} parent=1 // pred_check_branch
      %54 = sbr.rel (0) target = $region29
    $region28: #{discriminator_forward.1} parent=1 // pred_region
      _
    $region29: #{discriminator_forward.1} parent=1 // pred_fallthru
      _
    // Predicated region
    $region30: #{discriminator_forward.1} parent=1 // pred_check
      _
    $region31: #{discriminator_forward.1} parent=1 // pred_check_branch
      %56 = sbr.rel (0) target = $region33
    $region32: #{discriminator_forward.1} parent=1 // pred_region
      %s58 = ssub.s32 16384, 16384
      %59 = vsyncadd [#allocation7], %s58
      %s60 = sshll.u32 [#allocation8], 4
      %s61 = int_to_ptr.vmem [resolvable:$true] %s60
      %66 = dma.hbm_to_vmem [thread:$0]  %s8, 16384, %s61, [#allocation7], 256, 256, 16
    $region33: #{discriminator_forward.1} parent=1 // pred_fallthru
      _
    // Predicated region
    $region34: #{discriminator_forward.1} parent=1 // pred_check
      _
    $region35: #{discriminator_forward.1} parent=1 // pred_check_branch
      %68 = sbr.rel (0) target = $region37
    $region36: #{discriminator_forward.1} parent=1 // pred_region
      _
    $region37: #{discriminator_forward.1} parent=1 // pred_fallthru
      _
    // Predicated region
    $region38: #{discriminator_forward.1} parent=1 // pred_check
      _
    $region39: #{discriminator_forward.1} parent=1 // pred_check_branch
      %70 = sbr.rel (0) target = $region41
    $region40: #{discriminator_forward.1} parent=1 // pred_region
      %s72 = ssub.s32 4096, 4096
      %73 = vsyncadd [#allocation10], %s72
      %s74 = sshll.u32 [#allocation9], 4
      %s75 = int_to_ptr.vmem [resolvable:$true] %s74
      %80 = dma.hbm_to_vmem [thread:$0]  %s10, 4096, %s75, [#allocation10], 64, 64, 4
    $region41: #{discriminator_forward.1} parent=1 // pred_fallthru
      _
    // Predicated region
    $region42: #{discriminator_forward.1} parent=1 // pred_check
      _
    $region43: #{discriminator_forward.1} parent=1 // pred_check_branch
      %82 = sbr.rel (0) target = $region45
    $region44: #{discriminator_forward.1} parent=1 // pred_region
      _
    $region45: #{discriminator_forward.1} parent=1 // pred_fallthru
      _
    // Predicated region
    $region46: #{discriminator_forward.1} parent=1 // pred_check
      _
    $region47: #{discriminator_forward.1} parent=1 // pred_check_branch
      %84 = sbr.rel (0) target = $region49
    $region48: #{discriminator_forward.1} parent=1 // pred_region
      %85 = dma.done [#allocation5], 8192
    $region49: #{discriminator_forward.1} parent=1 // pred_fallthru
      _
    // Predicated region
    $region50: #{discriminator_forward.1} parent=1 // pred_check
      _
    $region51: #{discriminator_forward.1} parent=1 // pred_check_branch
      %87 = sbr.rel (0) target = $region53
    $region52: #{discriminator_forward.1} parent=1 // pred_region
      %88 = dma.done [#allocation7], 16384
    $region53: #{discriminator_forward.1} parent=1 // pred_fallthru
      _
    // Predicated region
    $region54: #{discriminator_forward.1} parent=1 // pred_check
      _
    $region55: #{discriminator_forward.1} parent=1 // pred_check_branch
      %90 = sbr.rel (0) target = $region57
    $region56: #{discriminator_forward.1} parent=1 // pred_region
      %91 = dma.done [#allocation7], 16384
    $region57: #{discriminator_forward.1} parent=1 // pred_fallthru
      _
    // Predicated region
    $region58: #{discriminator_forward.1} parent=1 // pred_check
      _
    $region59: #{discriminator_forward.1} parent=1 // pred_check_branch
      %93 = sbr.rel (0) target = $region61
    $region60: #{discriminator_forward.1} parent=1 // pred_region
      %94 = dma.done [#allocation10], 4096
    $region61: #{discriminator_forward.1} parent=1 // pred_fallthru
      _
    %v96 = vld [vmem:[%s1] sm:$0xff]
    %v97 = vld [vmem:[#allocation4] sm:$0xff]
    %v98 = vld [vmem:[#allocation4 + $0x8] sm:$0xff]
    %v99 = vld [vmem:[#allocation4 + $0x10] sm:$0xff]
    %v100 = vld [vmem:[#allocation4 + $0x18] sm:$0xff]
    %v101 = vld [vmem:[#allocation4 + $0x20] sm:$0xff]
    %v102 = vld [vmem:[#allocation4 + $0x28] sm:$0xff]
    %v103 = vld [vmem:[#allocation4 + $0x30] sm:$0xff]
    %v104 = vld [vmem:[#allocation4 + $0x38] sm:$0xff]
    %v105 = vld [vmem:[#allocation4 + $0x40] sm:$0xff]
    %v106 = vld [vmem:[#allocation4 + $0x48] sm:$0xff]
    %v107 = vld [vmem:[#allocation4 + $0x50] sm:$0xff]
    %v108 = vld [vmem:[#allocation4 + $0x58] sm:$0xff]
    %v109 = vld [vmem:[#allocation4 + $0x60] sm:$0xff]
    %v110 = vld [vmem:[#allocation4 + $0x68] sm:$0xff]
    %v111 = vld [vmem:[#allocation4 + $0x70] sm:$0xff]
    %v112 = vld [vmem:[#allocation4 + $0x78] sm:$0xff]
    %v113 = vld [vmem:[#allocation4 + $0x80] sm:$0xff]
    %v114 = vld [vmem:[#allocation4 + $0x88] sm:$0xff]
    %v115 = vld [vmem:[#allocation4 + $0x90] sm:$0xff]
    %v116 = vld [vmem:[#allocation4 + $0x98] sm:$0xff]
    %v117 = vld [vmem:[#allocation4 + $0xa0] sm:$0xff]
    %v118 = vld [vmem:[#allocation4 + $0xa8] sm:$0xff]
    %v119 = vld [vmem:[#allocation4 + $0xb0] sm:$0xff]
    %v120 = vld [vmem:[#allocation4 + $0xb8] sm:$0xff]
    %v121 = vld [vmem:[#allocation4 + $0xc0] sm:$0xff]
    %v122 = vld [vmem:[#allocation4 + $0xc8] sm:$0xff]
    %v123 = vld [vmem:[#allocation4 + $0xd0] sm:$0xff]
    %v124 = vld [vmem:[#allocation4 + $0xd8] sm:$0xff]
    %v125 = vld [vmem:[#allocation4 + $0xe0] sm:$0xff]
    %v126 = vld [vmem:[#allocation4 + $0xe8] sm:$0xff]
    %v127 = vld [vmem:[#allocation4 + $0xf0] sm:$0xff]
    %v128 = vld [vmem:[#allocation4 + $0xf8] sm:$0xff]
    %v129 = vld [vmem:[#allocation4 + $0x100] sm:$0xff]
    %v130 = vld [vmem:[#allocation4 + $0x108] sm:$0xff]
    %v131 = vld [vmem:[#allocation4 + $0x110] sm:$0xff]
    %v132 = vld [vmem:[#allocation4 + $0x118] sm:$0xff]
    %v133 = vld [vmem:[#allocation4 + $0x120] sm:$0xff]
    %v134 = vld [vmem:[#allocation4 + $0x128] sm:$0xff]
    %v135 = vld [vmem:[#allocation4 + $0x130] sm:$0xff]
    %v136 = vld [vmem:[#allocation4 + $0x138] sm:$0xff]
    %v137 = vld [vmem:[#allocation4 + $0x140] sm:$0xff]
    %v138 = vld [vmem:[#allocation4 + $0x148] sm:$0xff]
    %v139 = vld [vmem:[#allocation4 + $0x150] sm:$0xff]
    %v140 = vld [vmem:[#allocation4 + $0x158] sm:$0xff]
    %v141 = vld [vmem:[#allocation4 + $0x160] sm:$0xff]
    %v142 = vld [vmem:[#allocation4 + $0x168] sm:$0xff]
    %v143 = vld [vmem:[#allocation4 + $0x170] sm:$0xff]
    %v144 = vld [vmem:[#allocation4 + $0x178] sm:$0xff]
    %v145 = vld [vmem:[#allocation4 + $0x180] sm:$0xff]
    %v146 = vld [vmem:[#allocation4 + $0x188] sm:$0xff]
    %v147 = vld [vmem:[#allocation4 + $0x190] sm:$0xff]
    %v148 = vld [vmem:[#allocation4 + $0x198] sm:$0xff]
    %v149 = vld [vmem:[#allocation4 + $0x1a0] sm:$0xff]
    %v150 = vld [vmem:[#allocation4 + $0x1a8] sm:$0xff]
    %v151 = vld [vmem:[#allocation4 + $0x1b0] sm:$0xff]
    %v152 = vld [vmem:[#allocation4 + $0x1b8] sm:$0xff]
    %v153 = vld [vmem:[#allocation4 + $0x1c0] sm:$0xff]
    %v154 = vld [vmem:[#allocation4 + $0x1c8] sm:$0xff]
    %v155 = vld [vmem:[#allocation4 + $0x1d0] sm:$0xff]
    %v156 = vld [vmem:[#allocation4 + $0x1d8] sm:$0xff]
    %v157 = vld [vmem:[#allocation4 + $0x1e0] sm:$0xff]
    %v158 = vld [vmem:[#allocation4 + $0x1e8] sm:$0xff]
    %v159 = vld [vmem:[#allocation4 + $0x1f0] sm:$0xff]
    %v160 = vld [vmem:[#allocation4 + $0x1f8] sm:$0xff]
    %v161 = vld [vmem:[%s2] sm:$0xf]
    %v162 = vld [vmem:[%s4] sm:$0xff]
    %v163 = vld [vmem:[%s4 + $0x8] sm:$0xff]
    %v164 = vld [vmem:[%s4 + $0x10] sm:$0xff]
    %v165 = vld [vmem:[%s4 + $0x18] sm:$0xff]
    %v166 = vld [vmem:[%s4 + $0x20] sm:$0xff]
    %v167 = vld [vmem:[%s4 + $0x28] sm:$0xff]
    %v168 = vld [vmem:[%s4 + $0x30] sm:$0xff]
    %v169 = vld [vmem:[%s4 + $0x38] sm:$0xff]
    %v170 = vld [vmem:[%s4 + $0x40] sm:$0xff]
    %v171 = vld [vmem:[%s4 + $0x48] sm:$0xff]
    %v172 = vld [vmem:[%s4 + $0x50] sm:$0xff]
    %v173 = vld [vmem:[%s4 + $0x58] sm:$0xff]
    %v174 = vld [vmem:[%s4 + $0x60] sm:$0xff]
    %v175 = vld [vmem:[%s4 + $0x68] sm:$0xff]
    %v176 = vld [vmem:[%s4 + $0x70] sm:$0xff]
    %v177 = vld [vmem:[%s4 + $0x78] sm:$0xff]
    %v178 = vld [vmem:[%s4 + $0x80] sm:$0xff]
    %v179 = vld [vmem:[%s4 + $0x88] sm:$0xff]
    %v180 = vld [vmem:[%s4 + $0x90] sm:$0xff]
    %v181 = vld [vmem:[%s4 + $0x98] sm:$0xff]
    %v182 = vld [vmem:[%s4 + $0xa0] sm:$0xff]
    %v183 = vld [vmem:[%s4 + $0xa8] sm:$0xff]
    %v184 = vld [vmem:[%s4 + $0xb0] sm:$0xff]
    %v185 = vld [vmem:[%s4 + $0xb8] sm:$0xff]
    %v186 = vld [vmem:[%s4 + $0xc0] sm:$0xff]
    %v187 = vld [vmem:[%s4 + $0xc8] sm:$0xff]
    %v188 = vld [vmem:[%s4 + $0xd0] sm:$0xff]
    %v189 = vld [vmem:[%s4 + $0xd8] sm:$0xff]
    %v190 = vld [vmem:[%s4 + $0xe0] sm:$0xff]
    %v191 = vld [vmem:[%s4 + $0xe8] sm:$0xff]
    %v192 = vld [vmem:[%s4 + $0xf0] sm:$0xff]
    %v193 = vld [vmem:[%s4 + $0xf8] sm:$0xff]
    %v226 = vunpack.c.l.b16 %v162
    %v227 = vunpack.c.h.b16 %v162
    %v228 = vunpack.c.l.b16 %v163
    %v229 = vunpack.c.h.b16 %v163
    %v230 = vunpack.c.l.b16 %v164
    %v231 = vunpack.c.h.b16 %v164
    %v232 = vunpack.c.l.b16 %v165
    %v233 = vunpack.c.h.b16 %v165
    %v234 = vunpack.c.l.b16 %v166
    %v235 = vunpack.c.h.b16 %v166
    %v236 = vunpack.c.l.b16 %v167
    %v237 = vunpack.c.h.b16 %v167
    %v238 = vunpack.c.l.b16 %v168
    %v239 = vunpack.c.h.b16 %v168
    %v240 = vunpack.c.l.b16 %v169
    %v241 = vunpack.c.h.b16 %v169
    %v242 = vunpack.c.l.b16 %v170
    %v243 = vunpack.c.h.b16 %v170
    %v244 = vunpack.c.l.b16 %v171
    %v245 = vunpack.c.h.b16 %v171
    %v246 = vunpack.c.l.b16 %v172
    %v247 = vunpack.c.h.b16 %v172
    %v248 = vunpack.c.l.b16 %v173
    %v249 = vunpack.c.h.b16 %v173
    %v250 = vunpack.c.l.b16 %v174
    %v251 = vunpack.c.h.b16 %v174
    %v252 = vunpack.c.l.b16 %v175
    %v253 = vunpack.c.h.b16 %v175
    %v254 = vunpack.c.l.b16 %v176
    %v255 = vunpack.c.h.b16 %v176
    %v256 = vunpack.c.l.b16 %v177
    %v257 = vunpack.c.h.b16 %v177
    %v258 = vunpack.c.l.b16 %v178
    %v259 = vunpack.c.h.b16 %v178
    %v260 = vunpack.c.l.b16 %v179
    %v261 = vunpack.c.h.b16 %v179
    %v262 = vunpack.c.l.b16 %v180
    %v263 = vunpack.c.h.b16 %v180
    %v264 = vunpack.c.l.b16 %v181
    %v265 = vunpack.c.h.b16 %v181
    %v266 = vunpack.c.l.b16 %v182
    %v267 = vunpack.c.h.b16 %v182
    %v268 = vunpack.c.l.b16 %v183
    %v269 = vunpack.c.h.b16 %v183
    %v270 = vunpack.c.l.b16 %v184
    %v271 = vunpack.c.h.b16 %v184
    %v272 = vunpack.c.l.b16 %v185
    %v273 = vunpack.c.h.b16 %v185
    %v274 = vunpack.c.l.b16 %v186
    %v275 = vunpack.c.h.b16 %v186
    %v276 = vunpack.c.l.b16 %v187
    %v277 = vunpack.c.h.b16 %v187
    %v278 = vunpack.c.l.b16 %v188
    %v279 = vunpack.c.h.b16 %v188
    %v280 = vunpack.c.l.b16 %v189
    %v281 = vunpack.c.h.b16 %v189
    %v282 = vunpack.c.l.b16 %v190
    %v283 = vunpack.c.h.b16 %v190
    %v284 = vunpack.c.l.b16 %v191
    %v285 = vunpack.c.h.b16 %v191
    %v286 = vunpack.c.l.b16 %v192
    %v287 = vunpack.c.h.b16 %v192
    %v288 = vunpack.c.l.b16 %v193
    %v289 = vunpack.c.h.b16 %v193
    %v290 = vpack.c.b16 %v230, %v226
    %v291 = vpack.c.b16 %v231, %v227
    %v292 = vpack.c.b16 %v232, %v228
    %v293 = vpack.c.b16 %v233, %v229
    %v294 = vpack.c.b16 %v238, %v234
    %v295 = vpack.c.b16 %v239, %v235
    %v296 = vpack.c.b16 %v240, %v236
    %v297 = vpack.c.b16 %v241, %v237
    %v298 = vpack.c.b16 %v246, %v242
    %v299 = vpack.c.b16 %v247, %v243
    %v300 = vpack.c.b16 %v248, %v244
    %v301 = vpack.c.b16 %v249, %v245
    %v302 = vpack.c.b16 %v254, %v250
    %v303 = vpack.c.b16 %v255, %v251
    %v304 = vpack.c.b16 %v256, %v252
    %v305 = vpack.c.b16 %v257, %v253
    %v306 = vpack.c.b16 %v262, %v258
    %v307 = vpack.c.b16 %v263, %v259
    %v308 = vpack.c.b16 %v264, %v260
    %v309 = vpack.c.b16 %v265, %v261
    %v310 = vpack.c.b16 %v270, %v266
    %v311 = vpack.c.b16 %v271, %v267
    %v312 = vpack.c.b16 %v272, %v268
    %v313 = vpack.c.b16 %v273, %v269
    %v314 = vpack.c.b16 %v278, %v274
    %v315 = vpack.c.b16 %v279, %v275
    %v316 = vpack.c.b16 %v280, %v276
    %v317 = vpack.c.b16 %v281, %v277
    %v318 = vpack.c.b16 %v286, %v282
    %v319 = vpack.c.b16 %v287, %v283
    %v320 = vpack.c.b16 %v288, %v284
    %v321 = vpack.c.b16 %v289, %v285
    %354 = vmatprep.subr.bf16.mxu0 %v291
    %355 = vmatpush1.bf16.msra.mxu0 %v290
    %356 = vmatprep.subr.bf16.mxu0 %v295
    %357 = vmatpush1.bf16.msra.mxu0 %v294
    %358 = vmatprep.subr.bf16.mxu0 %v299
    %359 = vmatpush1.bf16.msra.mxu0 %v298
    %360 = vmatprep.subr.bf16.mxu0 %v303
    %361 = vmatpush1.bf16.msra.mxu0 %v302
    %362 = vmatprep.subr.bf16.mxu0 %v307
    %363 = vmatpush1.bf16.msra.mxu0 %v306
    %364 = vmatprep.subr.bf16.mxu0 %v311
    %365 = vmatpush1.bf16.msra.mxu0 %v310
    %366 = vmatprep.subr.bf16.mxu0 %v315
    %367 = vmatpush1.bf16.msra.mxu0 %v314
    %368 = vmatprep.subr.bf16.mxu0 %v319
    %369 = vmatpush1.bf16.msra.mxu0 %v318
    %370 = vmatprep.subr.bf16.mxu0 0
    %371 = vmatpush1.bf16.msra.mxu0 0
    %372 = vmatprep.subr.bf16.mxu0 0
    %373 = vmatpush1.bf16.msra.mxu0 0
    %374 = vmatprep.subr.bf16.mxu0 0
    %375 = vmatpush1.bf16.msra.mxu0 0
    %376 = vmatprep.subr.bf16.mxu0 0
    %377 = vmatpush1.bf16.msra.mxu0 0
    %378 = vmatprep.subr.bf16.mxu0 0
    %379 = vmatpush1.bf16.msra.mxu0 0
    %380 = vmatprep.subr.bf16.mxu0 0
    %381 = vmatpush1.bf16.msra.mxu0 0
    %382 = vmatprep.subr.bf16.mxu0 0
    %383 = vmatpush1.bf16.msra.mxu0 0
    %384 = vmatprep.subr.bf16.mxu0 0
    %385 = vmatpush1.bf16.msra.mxu0 0
    %386 = vmatprep.mubr.bf16.mxu0 0
    %387 = vmatmul.mubr.bf16.gmra.mrb[0].mxu0 %v161
    %v388 = vpop.f32.mrb[0].mxu0
    %v389 = vadd.f32 0.0, %v388
    %v390 = vpop.f32.mrb[0].mxu0
    %v391 = vadd.f32 0.0, %v390
    %v392 = vpop.f32.mrb[0].mxu0
    %v393 = vpop.f32.mrb[0].mxu0
    %394 = vdwg.mxu0
    %395 = vmatprep.subr.bf16.mxu0 %v293
    %396 = vmatpush1.bf16.msra.mxu0 %v292
    %397 = vmatprep.subr.bf16.mxu0 %v297
    %398 = vmatpush1.bf16.msra.mxu0 %v296
    %399 = vmatprep.subr.bf16.mxu0 %v301
    %400 = vmatpush1.bf16.msra.mxu0 %v300
    %401 = vmatprep.subr.bf16.mxu0 %v305
    %402 = vmatpush1.bf16.msra.mxu0 %v304
    %403 = vmatprep.subr.bf16.mxu0 %v309
    %404 = vmatpush1.bf16.msra.mxu0 %v308
    %405 = vmatprep.subr.bf16.mxu0 %v313
    %406 = vmatpush1.bf16.msra.mxu0 %v312
    %407 = vmatprep.subr.bf16.mxu0 %v317
    %408 = vmatpush1.bf16.msra.mxu0 %v316
    %409 = vmatprep.subr.bf16.mxu0 %v321
    %410 = vmatpush1.bf16.msra.mxu0 %v320
    %411 = vmatprep.subr.bf16.mxu0 0
    %412 = vmatpush1.bf16.msra.mxu0 0
    %413 = vmatprep.subr.bf16.mxu0 0
    %414 = vmatpush1.bf16.msra.mxu0 0
    %415 = vmatprep.subr.bf16.mxu0 0
    %416 = vmatpush1.bf16.msra.mxu0 0
    %417 = vmatprep.subr.bf16.mxu0 0
    %418 = vmatpush1.bf16.msra.mxu0 0
    %419 = vmatprep.subr.bf16.mxu0 0
    %420 = vmatpush1.bf16.msra.mxu0 0
    %421 = vmatprep.subr.bf16.mxu0 0
    %422 = vmatpush1.bf16.msra.mxu0 0
    %423 = vmatprep.subr.bf16.mxu0 0
    %424 = vmatpush1.bf16.msra.mxu0 0
    %425 = vmatprep.subr.bf16.mxu0 0
    %426 = vmatpush1.bf16.msra.mxu0 0
    %427 = vmatprep.mubr.bf16.mxu0 0
    %428 = vmatmul.mubr.bf16.gmra.mrb[0].mxu0 %v161
    %v429 = vpop.f32.mrb[0].mxu0
    %v430 = vadd.f32 0.0, %v429
    %v431 = vpop.f32.mrb[0].mxu0
    %v432 = vadd.f32 0.0, %v431
    %v433 = vpop.f32.mrb[0].mxu0
    %v434 = vpop.f32.mrb[0].mxu0
    %435 = vdwg.mxu0
    %v437 = vunpack.c.l.b16 %v96
    %v438 = vunpack.c.h.b16 %v96
    %v439 = vpack.c.b16 %v437, %v437
    %v440 = vpack.c.b16 %v438, %v438
    %v507 = vunpack.c.l.b16 %v97
    %v508 = vunpack.c.h.b16 %v97
    %v509 = vunpack.c.l.b16 %v98
    %v510 = vunpack.c.h.b16 %v98
    %v511 = vunpack.c.l.b16 %v99
    %v512 = vunpack.c.h.b16 %v99
    %v513 = vunpack.c.l.b16 %v100
    %v514 = vunpack.c.h.b16 %v100
    %v515 = vunpack.c.l.b16 %v101
    %v516 = vunpack.c.h.b16 %v101
    %v517 = vunpack.c.l.b16 %v102
    %v518 = vunpack.c.h.b16 %v102
    %v519 = vunpack.c.l.b16 %v103
    %v520 = vunpack.c.h.b16 %v103
    %v521 = vunpack.c.l.b16 %v104
    %v522 = vunpack.c.h.b16 %v104
    %v523 = vunpack.c.l.b16 %v105
    %v524 = vunpack.c.h.b16 %v105
    %v525 = vunpack.c.l.b16 %v106
    %v526 = vunpack.c.h.b16 %v106
    %v527 = vunpack.c.l.b16 %v107
    %v528 = vunpack.c.h.b16 %v107
    %v529 = vunpack.c.l.b16 %v108
    %v530 = vunpack.c.h.b16 %v108
    %v531 = vunpack.c.l.b16 %v109
    %v532 = vunpack.c.h.b16 %v109
    %v533 = vunpack.c.l.b16 %v110
    %v534 = vunpack.c.h.b16 %v110
    %v535 = vunpack.c.l.b16 %v111
    %v536 = vunpack.c.h.b16 %v111
    %v537 = vunpack.c.l.b16 %v112
    %v538 = vunpack.c.h.b16 %v112
    %v539 = vunpack.c.l.b16 %v113
    %v540 = vunpack.c.h.b16 %v113
    %v541 = vunpack.c.l.b16 %v114
    %v542 = vunpack.c.h.b16 %v114
    %v543 = vunpack.c.l.b16 %v115
    %v544 = vunpack.c.h.b16 %v115
    %v545 = vunpack.c.l.b16 %v116
    %v546 = vunpack.c.h.b16 %v116
    %v547 = vunpack.c.l.b16 %v117
    %v548 = vunpack.c.h.b16 %v117
    %v549 = vunpack.c.l.b16 %v118
    %v550 = vunpack.c.h.b16 %v118
    %v551 = vunpack.c.l.b16 %v119
    %v552 = vunpack.c.h.b16 %v119
    %v553 = vunpack.c.l.b16 %v120
    %v554 = vunpack.c.h.b16 %v120
    %v555 = vunpack.c.l.b16 %v121
    %v556 = vunpack.c.h.b16 %v121
    %v557 = vunpack.c.l.b16 %v122
    %v558 = vunpack.c.h.b16 %v122
    %v559 = vunpack.c.l.b16 %v123
    %v560 = vunpack.c.h.b16 %v123
    %v561 = vunpack.c.l.b16 %v124
    %v562 = vunpack.c.h.b16 %v124
    %v563 = vunpack.c.l.b16 %v125
    %v564 = vunpack.c.h.b16 %v125
    %v565 = vunpack.c.l.b16 %v126
    %v566 = vunpack.c.h.b16 %v126
    %v567 = vunpack.c.l.b16 %v127
    %v568 = vunpack.c.h.b16 %v127
    %v569 = vunpack.c.l.b16 %v128
    %v570 = vunpack.c.h.b16 %v128
    %v571 = vunpack.c.l.b16 %v129
    %v572 = vunpack.c.h.b16 %v129
    %v573 = vunpack.c.l.b16 %v130
    %v574 = vunpack.c.h.b16 %v130
    %v575 = vunpack.c.l.b16 %v131
    %v576 = vunpack.c.h.b16 %v131
    %v577 = vunpack.c.l.b16 %v132
    %v578 = vunpack.c.h.b16 %v132
    %v579 = vunpack.c.l.b16 %v133
    %v580 = vunpack.c.h.b16 %v133
    %v581 = vunpack.c.l.b16 %v134
    %v582 = vunpack.c.h.b16 %v134
    %v583 = vunpack.c.l.b16 %v135
    %v584 = vunpack.c.h.b16 %v135
    %v585 = vunpack.c.l.b16 %v136
    %v586 = vunpack.c.h.b16 %v136
    %v587 = vunpack.c.l.b16 %v137
    %v588 = vunpack.c.h.b16 %v137
    %v589 = vunpack.c.l.b16 %v138
    %v590 = vunpack.c.h.b16 %v138
    %v591 = vunpack.c.l.b16 %v139
    %v592 = vunpack.c.h.b16 %v139
    %v593 = vunpack.c.l.b16 %v140
    %v594 = vunpack.c.h.b16 %v140
    %v595 = vunpack.c.l.b16 %v141
    %v596 = vunpack.c.h.b16 %v141
    %v597 = vunpack.c.l.b16 %v142
    %v598 = vunpack.c.h.b16 %v142
    %v599 = vunpack.c.l.b16 %v143
    %v600 = vunpack.c.h.b16 %v143
    %v601 = vunpack.c.l.b16 %v144
    %v602 = vunpack.c.h.b16 %v144
    %v603 = vunpack.c.l.b16 %v145
    %v604 = vunpack.c.h.b16 %v145
    %v605 = vunpack.c.l.b16 %v146
    %v606 = vunpack.c.h.b16 %v146
    %v607 = vunpack.c.l.b16 %v147
    %v608 = vunpack.c.h.b16 %v147
    %v609 = vunpack.c.l.b16 %v148
    %v610 = vunpack.c.h.b16 %v148
    %v611 = vunpack.c.l.b16 %v149
    %v612 = vunpack.c.h.b16 %v149
    %v613 = vunpack.c.l.b16 %v150
    %v614 = vunpack.c.h.b16 %v150
    %v615 = vunpack.c.l.b16 %v151
    %v616 = vunpack.c.h.b16 %v151
    %v617 = vunpack.c.l.b16 %v152
    %v618 = vunpack.c.h.b16 %v152
    %v619 = vunpack.c.l.b16 %v153
    %v620 = vunpack.c.h.b16 %v153
    %v621 = vunpack.c.l.b16 %v154
    %v622 = vunpack.c.h.b16 %v154
    %v623 = vunpack.c.l.b16 %v155
    %v624 = vunpack.c.h.b16 %v155
    %v625 = vunpack.c.l.b16 %v156
    %v626 = vunpack.c.h.b16 %v156
    %v627 = vunpack.c.l.b16 %v157
    %v628 = vunpack.c.h.b16 %v157
    %v629 = vunpack.c.l.b16 %v158
    %v630 = vunpack.c.h.b16 %v158
    %v631 = vunpack.c.l.b16 %v159
    %v632 = vunpack.c.h.b16 %v159
    %v633 = vunpack.c.l.b16 %v160
    %v634 = vunpack.c.h.b16 %v160
    %v635 = vpack.c.b16 %v511, %v507
    %v636 = vpack.c.b16 %v512, %v508
    %v637 = vpack.c.b16 %v513, %v509
    %v638 = vpack.c.b16 %v514, %v510
    %v639 = vpack.c.b16 %v519, %v515
    %v640 = vpack.c.b16 %v520, %v516
    %v641 = vpack.c.b16 %v521, %v517
    %v642 = vpack.c.b16 %v522, %v518
    %v643 = vpack.c.b16 %v527, %v523
    %v644 = vpack.c.b16 %v528, %v524
    %v645 = vpack.c.b16 %v529, %v525
    %v646 = vpack.c.b16 %v530, %v526
    %v647 = vpack.c.b16 %v535, %v531
    %v648 = vpack.c.b16 %v536, %v532
    %v649 = vpack.c.b16 %v537, %v533
    %v650 = vpack.c.b16 %v538, %v534
    %v651 = vpack.c.b16 %v543, %v539
    %v652 = vpack.c.b16 %v544, %v540
    %v653 = vpack.c.b16 %v545, %v541
    %v654 = vpack.c.b16 %v546, %v542
    %v655 = vpack.c.b16 %v551, %v547
    %v656 = vpack.c.b16 %v552, %v548
    %v657 = vpack.c.b16 %v553, %v549
    %v658 = vpack.c.b16 %v554, %v550
    %v659 = vpack.c.b16 %v559, %v555
    %v660 = vpack.c.b16 %v560, %v556
    %v661 = vpack.c.b16 %v561, %v557
    %v662 = vpack.c.b16 %v562, %v558
    %v663 = vpack.c.b16 %v567, %v563
    %v664 = vpack.c.b16 %v568, %v564
    %v665 = vpack.c.b16 %v569, %v565
    %v666 = vpack.c.b16 %v570, %v566
    %v667 = vpack.c.b16 %v575, %v571
    %v668 = vpack.c.b16 %v576, %v572
    %v669 = vpack.c.b16 %v577, %v573
    %v670 = vpack.c.b16 %v578, %v574
    %v671 = vpack.c.b16 %v583, %v579
    %v672 = vpack.c.b16 %v584, %v580
    %v673 = vpack.c.b16 %v585, %v581
    %v674 = vpack.c.b16 %v586, %v582
    %v675 = vpack.c.b16 %v591, %v587
    %v676 = vpack.c.b16 %v592, %v588
    %v677 = vpack.c.b16 %v593, %v589
    %v678 = vpack.c.b16 %v594, %v590
    %v679 = vpack.c.b16 %v599, %v595
    %v680 = vpack.c.b16 %v600, %v596
    %v681 = vpack.c.b16 %v601, %v597
    %v682 = vpack.c.b16 %v602, %v598
    %v683 = vpack.c.b16 %v607, %v603
    %v684 = vpack.c.b16 %v608, %v604
    %v685 = vpack.c.b16 %v609, %v605
    %v686 = vpack.c.b16 %v610, %v606
    %v687 = vpack.c.b16 %v615, %v611
    %v688 = vpack.c.b16 %v616, %v612
    %v689 = vpack.c.b16 %v617, %v613
    %v690 = vpack.c.b16 %v618, %v614
    %v691 = vpack.c.b16 %v623, %v619
    %v692 = vpack.c.b16 %v624, %v620
    %v693 = vpack.c.b16 %v625, %v621
    %v694 = vpack.c.b16 %v626, %v622
    %v695 = vpack.c.b16 %v631, %v627
    %v696 = vpack.c.b16 %v632, %v628
    %v697 = vpack.c.b16 %v633, %v629
    %v698 = vpack.c.b16 %v634, %v630
    %763 = vmatprep.subr.bf16.mxu0 %v636
    %764 = vmatpush1.bf16.msra.mxu0 %v635
    %765 = vmatprep.subr.bf16.mxu0 %v640
    %766 = vmatpush1.bf16.msra.mxu0 %v639
    %767 = vmatprep.subr.bf16.mxu0 %v644
    %768 = vmatpush1.bf16.msra.mxu0 %v643
    %769 = vmatprep.subr.bf16.mxu0 %v648
    %770 = vmatpush1.bf16.msra.mxu0 %v647
    %771 = vmatprep.subr.bf16.mxu0 %v652
    %772 = vmatpush1.bf16.msra.mxu0 %v651
    %773 = vmatprep.subr.bf16.mxu0 %v656
    %774 = vmatpush1.bf16.msra.mxu0 %v655
    %775 = vmatprep.subr.bf16.mxu0 %v660
    %776 = vmatpush1.bf16.msra.mxu0 %v659
    %777 = vmatprep.subr.bf16.mxu0 %v664
    %778 = vmatpush1.bf16.msra.mxu0 %v663
    %779 = vmatprep.subr.bf16.mxu0 %v668
    %780 = vmatpush1.bf16.msra.mxu0 %v667
    %781 = vmatprep.subr.bf16.mxu0 %v672
    %782 = vmatpush1.bf16.msra.mxu0 %v671
    %783 = vmatprep.subr.bf16.mxu0 %v676
    %784 = vmatpush1.bf16.msra.mxu0 %v675
    %785 = vmatprep.subr.bf16.mxu0 %v680
    %786 = vmatpush1.bf16.msra.mxu0 %v679
    %787 = vmatprep.subr.bf16.mxu0 %v684
    %788 = vmatpush1.bf16.msra.mxu0 %v683
    %789 = vmatprep.subr.bf16.mxu0 %v688
    %790 = vmatpush1.bf16.msra.mxu0 %v687
    %791 = vmatprep.subr.bf16.mxu0 %v692
    %792 = vmatpush1.bf16.msra.mxu0 %v691
    %793 = vmatprep.subr.bf16.mxu0 %v696
    %794 = vmatpush1.bf16.msra.mxu0 %v695
    %795 = vmatprep.mubr.bf16.mxu0 %v440
    %796 = vmatmul.mubr.bf16.gmra.mrb[0].mxu0 %v439
    %v797 = vpop.f32.mrb[0].mxu0
    %v798 = vadd.f32 %v389, %v797
    %v799 = vpop.f32.mrb[0].mxu0
    %v800 = vadd.f32 %v391, %v799
    %v801 = vpop.f32.mrb[0].mxu0
    %v802 = vpop.f32.mrb[0].mxu0
    %803 = vdwg.mxu0
    %804 = vmatprep.subr.bf16.mxu0 %v638
    %805 = vmatpush1.bf16.msra.mxu0 %v637
    %806 = vmatprep.subr.bf16.mxu0 %v642
    %807 = vmatpush1.bf16.msra.mxu0 %v641
    %808 = vmatprep.subr.bf16.mxu0 %v646
    %809 = vmatpush1.bf16.msra.mxu0 %v645
    %810 = vmatprep.subr.bf16.mxu0 %v650
    %811 = vmatpush1.bf16.msra.mxu0 %v649
    %812 = vmatprep.subr.bf16.mxu0 %v654
    %813 = vmatpush1.bf16.msra.mxu0 %v653
    %814 = vmatprep.subr.bf16.mxu0 %v658
    %815 = vmatpush1.bf16.msra.mxu0 %v657
    %816 = vmatprep.subr.bf16.mxu0 %v662
    %817 = vmatpush1.bf16.msra.mxu0 %v661
    %818 = vmatprep.subr.bf16.mxu0 %v666
    %819 = vmatpush1.bf16.msra.mxu0 %v665
    %820 = vmatprep.subr.bf16.mxu0 %v670
    %821 = vmatpush1.bf16.msra.mxu0 %v669
    %822 = vmatprep.subr.bf16.mxu0 %v674
    %823 = vmatpush1.bf16.msra.mxu0 %v673
    %824 = vmatprep.subr.bf16.mxu0 %v678
    %825 = vmatpush1.bf16.msra.mxu0 %v677
    %826 = vmatprep.subr.bf16.mxu0 %v682
    %827 = vmatpush1.bf16.msra.mxu0 %v681
    %828 = vmatprep.subr.bf16.mxu0 %v686
    %829 = vmatpush1.bf16.msra.mxu0 %v685
    %830 = vmatprep.subr.bf16.mxu0 %v690
    %831 = vmatpush1.bf16.msra.mxu0 %v689
    %832 = vmatprep.subr.bf16.mxu0 %v694
    %833 = vmatpush1.bf16.msra.mxu0 %v693
    %834 = vmatprep.subr.bf16.mxu0 %v698
    %835 = vmatpush1.bf16.msra.mxu0 %v697
    %836 = vmatprep.mubr.bf16.mxu0 %v440
    %837 = vmatmul.mubr.bf16.gmra.mrb[0].mxu0 %v439
    %v838 = vpop.f32.mrb[0].mxu0
    %v839 = vadd.f32 %v430, %v838
    %v840 = vpop.f32.mrb[0].mxu0
    %v841 = vadd.f32 %v432, %v840
    %v842 = vpop.f32.mrb[0].mxu0
    %v843 = vpop.f32.mrb[0].mxu0
    %844 = vdwg.mxu0
    %v845 = vld [vmem:[%s5] sm:$0xf]
    %v847 = vlaneseq
    %v848 = vshrl.u32 %v847, 7
    %v849 = vsub.s32 0, %v848
    %v850 = vrot.slane %v845, %v849
    %v851 = vlaneseq
    %v852 = vshrl.u32 %v851, 7
    %v853 = vsub.s32 1, %v852
    %v854 = vrot.slane %v845, %v853
    %v855 = vlaneseq
    %v856 = vshrl.u32 %v855, 7
    %v857 = vsub.s32 2, %v856
    %v858 = vrot.slane %v845, %v857
    %v859 = vlaneseq
    %v860 = vshrl.u32 %v859, 7
    %v861 = vsub.s32 3, %v860
    %v862 = vrot.slane %v845, %v861
    %v867 = vadd.f32 %v798, %v850
    %v868 = vadd.f32 %v800, %v854
    %v869 = vadd.f32 %v839, %v858
    %v870 = vadd.f32 %v841, %v862
    %v871 = vmul.f32 %v867, 0.2
    %v872 = vmul.f32 %v868, 0.2
    %v873 = vmul.f32 %v869, 0.2
    %v874 = vmul.f32 %v870, 0.2
    %v875 = vmax.f32 %v867, %v871
    %v876 = vmax.f32 %v868, %v872
    %v877 = vmax.f32 %v869, %v873
    %v878 = vmax.f32 %v870, %v874
    %v879 = vpack.c.bf16 %v875, %v875
    %v880 = vpack.c.bf16 %v876, %v876
    %v881 = vpack.c.bf16 %v877, %v877
    %v882 = vpack.c.bf16 %v878, %v878
    %v883 = vld [vmem:[#allocation6] sm:$0xff]
    %v884 = vld [vmem:[#allocation6 + $0x8] sm:$0xff]
    %v885 = vld [vmem:[#allocation6 + $0x10] sm:$0xff]
    %v886 = vld [vmem:[#allocation6 + $0x18] sm:$0xff]
    %v887 = vld [vmem:[#allocation6 + $0x20] sm:$0xff]
    %v888 = vld [vmem:[#allocation6 + $0x28] sm:$0xff]
    %v889 = vld [vmem:[#allocation6 + $0x30] sm:$0xff]
    %v890 = vld [vmem:[#allocation6 + $0x38] sm:$0xff]
    %v891 = vld [vmem:[#allocation6 + $0x40] sm:$0xff]
    %v892 = vld [vmem:[#allocation6 + $0x48] sm:$0xff]
    %v893 = vld [vmem:[#allocation6 + $0x50] sm:$0xff]
    %v894 = vld [vmem:[#allocation6 + $0x58] sm:$0xff]
    %v895 = vld [vmem:[#allocation6 + $0x60] sm:$0xff]
    %v896 = vld [vmem:[#allocation6 + $0x68] sm:$0xff]
    %v897 = vld [vmem:[#allocation6 + $0x70] sm:$0xff]
    %v898 = vld [vmem:[#allocation6 + $0x78] sm:$0xff]
    %v899 = vld [vmem:[#allocation6 + $0x80] sm:$0xff]
    %v900 = vld [vmem:[#allocation6 + $0x88] sm:$0xff]
    %v901 = vld [vmem:[#allocation6 + $0x90] sm:$0xff]
    %v902 = vld [vmem:[#allocation6 + $0x98] sm:$0xff]
    %v903 = vld [vmem:[#allocation6 + $0xa0] sm:$0xff]
    %v904 = vld [vmem:[#allocation6 + $0xa8] sm:$0xff]
    %v905 = vld [vmem:[#allocation6 + $0xb0] sm:$0xff]
    %v906 = vld [vmem:[#allocation6 + $0xb8] sm:$0xff]
    %v907 = vld [vmem:[#allocation6 + $0xc0] sm:$0xff]
    %v908 = vld [vmem:[#allocation6 + $0xc8] sm:$0xff]
    %v909 = vld [vmem:[#allocation6 + $0xd0] sm:$0xff]
    %v910 = vld [vmem:[#allocation6 + $0xd8] sm:$0xff]
    %v911 = vld [vmem:[#allocation6 + $0xe0] sm:$0xff]
    %v912 = vld [vmem:[#allocation6 + $0xe8] sm:$0xff]
    %v913 = vld [vmem:[#allocation6 + $0xf0] sm:$0xff]
    %v914 = vld [vmem:[#allocation6 + $0xf8] sm:$0xff]
    %v915 = vld [vmem:[#allocation6 + $0x100] sm:$0xff]
    %v916 = vld [vmem:[#allocation6 + $0x108] sm:$0xff]
    %v917 = vld [vmem:[#allocation6 + $0x110] sm:$0xff]
    %v918 = vld [vmem:[#allocation6 + $0x118] sm:$0xff]
    %v919 = vld [vmem:[#allocation6 + $0x120] sm:$0xff]
    %v920 = vld [vmem:[#allocation6 + $0x128] sm:$0xff]
    %v921 = vld [vmem:[#allocation6 + $0x130] sm:$0xff]
    %v922 = vld [vmem:[#allocation6 + $0x138] sm:$0xff]
    %v923 = vld [vmem:[#allocation6 + $0x140] sm:$0xff]
    %v924 = vld [vmem:[#allocation6 + $0x148] sm:$0xff]
    %v925 = vld [vmem:[#allocation6 + $0x150] sm:$0xff]
    %v926 = vld [vmem:[#allocation6 + $0x158] sm:$0xff]
    %v927 = vld [vmem:[#allocation6 + $0x160] sm:$0xff]
    %v928 = vld [vmem:[#allocation6 + $0x168] sm:$0xff]
    %v929 = vld [vmem:[#allocation6 + $0x170] sm:$0xff]
    %v930 = vld [vmem:[#allocation6 + $0x178] sm:$0xff]
    %v931 = vld [vmem:[#allocation6 + $0x180] sm:$0xff]
    %v932 = vld [vmem:[#allocation6 + $0x188] sm:$0xff]
    %v933 = vld [vmem:[#allocation6 + $0x190] sm:$0xff]
    %v934 = vld [vmem:[#allocation6 + $0x198] sm:$0xff]
    %v935 = vld [vmem:[#allocation6 + $0x1a0] sm:$0xff]
    %v936 = vld [vmem:[#allocation6 + $0x1a8] sm:$0xff]
    %v937 = vld [vmem:[#allocation6 + $0x1b0] sm:$0xff]
    %v938 = vld [vmem:[#allocation6 + $0x1b8] sm:$0xff]
    %v939 = vld [vmem:[#allocation6 + $0x1c0] sm:$0xff]
    %v940 = vld [vmem:[#allocation6 + $0x1c8] sm:$0xff]
    %v941 = vld [vmem:[#allocation6 + $0x1d0] sm:$0xff]
    %v942 = vld [vmem:[#allocation6 + $0x1d8] sm:$0xff]
    %v943 = vld [vmem:[#allocation6 + $0x1e0] sm:$0xff]
    %v944 = vld [vmem:[#allocation6 + $0x1e8] sm:$0xff]
    %v945 = vld [vmem:[#allocation6 + $0x1f0] sm:$0xff]
    %v946 = vld [vmem:[#allocation6 + $0x1f8] sm:$0xff]
    %v947 = vld [vmem:[#allocation6 + $0x200] sm:$0xff]
    %v948 = vld [vmem:[#allocation6 + $0x208] sm:$0xff]
    %v949 = vld [vmem:[#allocation6 + $0x210] sm:$0xff]
    %v950 = vld [vmem:[#allocation6 + $0x218] sm:$0xff]
    %v951 = vld [vmem:[#allocation6 + $0x220] sm:$0xff]
    %v952 = vld [vmem:[#allocation6 + $0x228] sm:$0xff]
    %v953 = vld [vmem:[#allocation6 + $0x230] sm:$0xff]
    %v954 = vld [vmem:[#allocation6 + $0x238] sm:$0xff]
    %v955 = vld [vmem:[#allocation6 + $0x240] sm:$0xff]
    %v956 = vld [vmem:[#allocation6 + $0x248] sm:$0xff]
    %v957 = vld [vmem:[#allocation6 + $0x250] sm:$0xff]
    %v958 = vld [vmem:[#allocation6 + $0x258] sm:$0xff]
    %v959 = vld [vmem:[#allocation6 + $0x260] sm:$0xff]
    %v960 = vld [vmem:[#allocation6 + $0x268] sm:$0xff]
    %v961 = vld [vmem:[#allocation6 + $0x270] sm:$0xff]
    %v962 = vld [vmem:[#allocation6 + $0x278] sm:$0xff]
    %v963 = vld [vmem:[#allocation6 + $0x280] sm:$0xff]
    %v964 = vld [vmem:[#allocation6 + $0x288] sm:$0xff]
    %v965 = vld [vmem:[#allocation6 + $0x290] sm:$0xff]
    %v966 = vld [vmem:[#allocation6 + $0x298] sm:$0xff]
    %v967 = vld [vmem:[#allocation6 + $0x2a0] sm:$0xff]
    %v968 = vld [vmem:[#allocation6 + $0x2a8] sm:$0xff]
    %v969 = vld [vmem:[#allocation6 + $0x2b0] sm:$0xff]
    %v970 = vld [vmem:[#allocation6 + $0x2b8] sm:$0xff]
    %v971 = vld [vmem:[#allocation6 + $0x2c0] sm:$0xff]
    %v972 = vld [vmem:[#allocation6 + $0x2c8] sm:$0xff]
    %v973 = vld [vmem:[#allocation6 + $0x2d0] sm:$0xff]
    %v974 = vld [vmem:[#allocation6 + $0x2d8] sm:$0xff]
    %v975 = vld [vmem:[#allocation6 + $0x2e0] sm:$0xff]
    %v976 = vld [vmem:[#allocation6 + $0x2e8] sm:$0xff]
    %v977 = vld [vmem:[#allocation6 + $0x2f0] sm:$0xff]
    %v978 = vld [vmem:[#allocation6 + $0x2f8] sm:$0xff]
    %v979 = vld [vmem:[#allocation6 + $0x300] sm:$0xff]
    %v980 = vld [vmem:[#allocation6 + $0x308] sm:$0xff]
    %v981 = vld [vmem:[#allocation6 + $0x310] sm:$0xff]
    %v982 = vld [vmem:[#allocation6 + $0x318] sm:$0xff]
    %v983 = vld [vmem:[#allocation6 + $0x320] sm:$0xff]
    %v984 = vld [vmem:[#allocation6 + $0x328] sm:$0xff]
    %v985 = vld [vmem:[#allocation6 + $0x330] sm:$0xff]
    %v986 = vld [vmem:[#allocation6 + $0x338] sm:$0xff]
    %v987 = vld [vmem:[#allocation6 + $0x340] sm:$0xff]
    %v988 = vld [vmem:[#allocation6 + $0x348] sm:$0xff]
    %v989 = vld [vmem:[#allocation6 + $0x350] sm:$0xff]
    %v990 = vld [vmem:[#allocation6 + $0x358] sm:$0xff]
    %v991 = vld [vmem:[#allocation6 + $0x360] sm:$0xff]
    %v992 = vld [vmem:[#allocation6 + $0x368] sm:$0xff]
    %v993 = vld [vmem:[#allocation6 + $0x370] sm:$0xff]
    %v994 = vld [vmem:[#allocation6 + $0x378] sm:$0xff]
    %v995 = vld [vmem:[#allocation6 + $0x380] sm:$0xff]
    %v996 = vld [vmem:[#allocation6 + $0x388] sm:$0xff]
    %v997 = vld [vmem:[#allocation6 + $0x390] sm:$0xff]
    %v998 = vld [vmem:[#allocation6 + $0x398] sm:$0xff]
    %v999 = vld [vmem:[#allocation6 + $0x3a0] sm:$0xff]
    %v1000 = vld [vmem:[#allocation6 + $0x3a8] sm:$0xff]
    %v1001 = vld [vmem:[#allocation6 + $0x3b0] sm:$0xff]
    %v1002 = vld [vmem:[#allocation6 + $0x3b8] sm:$0xff]
    %v1003 = vld [vmem:[#allocation6 + $0x3c0] sm:$0xff]
    %v1004 = vld [vmem:[#allocation6 + $0x3c8] sm:$0xff]
    %v1005 = vld [vmem:[#allocation6 + $0x3d0] sm:$0xff]
    %v1006 = vld [vmem:[#allocation6 + $0x3d8] sm:$0xff]
    %v1007 = vld [vmem:[#allocation6 + $0x3e0] sm:$0xff]
    %v1008 = vld [vmem:[#allocation6 + $0x3e8] sm:$0xff]
    %v1009 = vld [vmem:[#allocation6 + $0x3f0] sm:$0xff]
    %v1010 = vld [vmem:[#allocation6 + $0x3f8] sm:$0xff]
    %v1011 = vld [vmem:[%s7] sm:$0xf]
    %v1013 = vlaneseq
    %v1014 = vshrl.u32 %v1013, 7
    %v1015 = vsub.s32 0, %v1014
    %v1016 = vrot.slane %v1011, %v1015
    %v1017 = vlaneseq
    %v1018 = vshrl.u32 %v1017, 7
    %v1019 = vsub.s32 1, %v1018
    %v1020 = vrot.slane %v1011, %v1019
    %v1021 = vlaneseq
    %v1022 = vshrl.u32 %v1021, 7
    %v1023 = vsub.s32 2, %v1022
    %v1024 = vrot.slane %v1011, %v1023
    %v1025 = vlaneseq
    %v1026 = vshrl.u32 %v1025, 7
    %v1027 = vsub.s32 3, %v1026
    %v1028 = vrot.slane %v1011, %v1027
    %v1161 = vunpack.c.l.b16 %v883
    %v1162 = vunpack.c.h.b16 %v883
    %v1163 = vunpack.c.l.b16 %v884
    %v1164 = vunpack.c.h.b16 %v884
    %v1165 = vunpack.c.l.b16 %v885
    %v1166 = vunpack.c.h.b16 %v885
    %v1167 = vunpack.c.l.b16 %v886
    %v1168 = vunpack.c.h.b16 %v886
    %v1169 = vunpack.c.l.b16 %v887
    %v1170 = vunpack.c.h.b16 %v887
    %v1171 = vunpack.c.l.b16 %v888
    %v1172 = vunpack.c.h.b16 %v888
    %v1173 = vunpack.c.l.b16 %v889
    %v1174 = vunpack.c.h.b16 %v889
    %v1175 = vunpack.c.l.b16 %v890
    %v1176 = vunpack.c.h.b16 %v890
    %v1177 = vunpack.c.l.b16 %v891
    %v1178 = vunpack.c.h.b16 %v891
    %v1179 = vunpack.c.l.b16 %v892
    %v1180 = vunpack.c.h.b16 %v892
    %v1181 = vunpack.c.l.b16 %v893
    %v1182 = vunpack.c.h.b16 %v893
    %v1183 = vunpack.c.l.b16 %v894
    %v1184 = vunpack.c.h.b16 %v894
    %v1185 = vunpack.c.l.b16 %v895
    %v1186 = vunpack.c.h.b16 %v895
    %v1187 = vunpack.c.l.b16 %v896
    %v1188 = vunpack.c.h.b16 %v896
    %v1189 = vunpack.c.l.b16 %v897
    %v1190 = vunpack.c.h.b16 %v897
    %v1191 = vunpack.c.l.b16 %v898
    %v1192 = vunpack.c.h.b16 %v898
    %v1193 = vunpack.c.l.b16 %v899
    %v1194 = vunpack.c.h.b16 %v899
    %v1195 = vunpack.c.l.b16 %v900
    %v1196 = vunpack.c.h.b16 %v900
    %v1197 = vunpack.c.l.b16 %v901
    %v1198 = vunpack.c.h.b16 %v901
    %v1199 = vunpack.c.l.b16 %v902
    %v1200 = vunpack.c.h.b16 %v902
    %v1201 = vunpack.c.l.b16 %v903
    %v1202 = vunpack.c.h.b16 %v903
    %v1203 = vunpack.c.l.b16 %v904
    %v1204 = vunpack.c.h.b16 %v904
    %v1205 = vunpack.c.l.b16 %v905
    %v1206 = vunpack.c.h.b16 %v905
    %v1207 = vunpack.c.l.b16 %v906
    %v1208 = vunpack.c.h.b16 %v906
    %v1209 = vunpack.c.l.b16 %v907
    %v1210 = vunpack.c.h.b16 %v907
    %v1211 = vunpack.c.l.b16 %v908
    %v1212 = vunpack.c.h.b16 %v908
    %v1213 = vunpack.c.l.b16 %v909
    %v1214 = vunpack.c.h.b16 %v909
    %v1215 = vunpack.c.l.b16 %v910
    %v1216 = vunpack.c.h.b16 %v910
    %v1217 = vunpack.c.l.b16 %v911
    %v1218 = vunpack.c.h.b16 %v911
    %v1219 = vunpack.c.l.b16 %v912
    %v1220 = vunpack.c.h.b16 %v912
    %v1221 = vunpack.c.l.b16 %v913
    %v1222 = vunpack.c.h.b16 %v913
    %v1223 = vunpack.c.l.b16 %v914
    %v1224 = vunpack.c.h.b16 %v914
    %v1225 = vunpack.c.l.b16 %v915
    %v1226 = vunpack.c.h.b16 %v915
    %v1227 = vunpack.c.l.b16 %v916
    %v1228 = vunpack.c.h.b16 %v916
    %v1229 = vunpack.c.l.b16 %v917
    %v1230 = vunpack.c.h.b16 %v917
    %v1231 = vunpack.c.l.b16 %v918
    %v1232 = vunpack.c.h.b16 %v918
    %v1233 = vunpack.c.l.b16 %v919
    %v1234 = vunpack.c.h.b16 %v919
    %v1235 = vunpack.c.l.b16 %v920
    %v1236 = vunpack.c.h.b16 %v920
    %v1237 = vunpack.c.l.b16 %v921
    %v1238 = vunpack.c.h.b16 %v921
    %v1239 = vunpack.c.l.b16 %v922
    %v1240 = vunpack.c.h.b16 %v922
    %v1241 = vunpack.c.l.b16 %v923
    %v1242 = vunpack.c.h.b16 %v923
    %v1243 = vunpack.c.l.b16 %v924
    %v1244 = vunpack.c.h.b16 %v924
    %v1245 = vunpack.c.l.b16 %v925
    %v1246 = vunpack.c.h.b16 %v925
    %v1247 = vunpack.c.l.b16 %v926
    %v1248 = vunpack.c.h.b16 %v926
    %v1249 = vunpack.c.l.b16 %v927
    %v1250 = vunpack.c.h.b16 %v927
    %v1251 = vunpack.c.l.b16 %v928
    %v1252 = vunpack.c.h.b16 %v928
    %v1253 = vunpack.c.l.b16 %v929
    %v1254 = vunpack.c.h.b16 %v929
    %v1255 = vunpack.c.l.b16 %v930
    %v1256 = vunpack.c.h.b16 %v930
    %v1257 = vunpack.c.l.b16 %v931
    %v1258 = vunpack.c.h.b16 %v931
    %v1259 = vunpack.c.l.b16 %v932
    %v1260 = vunpack.c.h.b16 %v932
    %v1261 = vunpack.c.l.b16 %v933
    %v1262 = vunpack.c.h.b16 %v933
    %v1263 = vunpack.c.l.b16 %v934
    %v1264 = vunpack.c.h.b16 %v934
    %v1265 = vunpack.c.l.b16 %v935
    %v1266 = vunpack.c.h.b16 %v935
    %v1267 = vunpack.c.l.b16 %v936
    %v1268 = vunpack.c.h.b16 %v936
    %v1269 = vunpack.c.l.b16 %v937
    %v1270 = vunpack.c.h.b16 %v937
    %v1271 = vunpack.c.l.b16 %v938
    %v1272 = vunpack.c.h.b16 %v938
    %v1273 = vunpack.c.l.b16 %v939
    %v1274 = vunpack.c.h.b16 %v939
    %v1275 = vunpack.c.l.b16 %v940
    %v1276 = vunpack.c.h.b16 %v940
    %v1277 = vunpack.c.l.b16 %v941
    %v1278 = vunpack.c.h.b16 %v941
    %v1279 = vunpack.c.l.b16 %v942
    %v1280 = vunpack.c.h.b16 %v942
    %v1281 = vunpack.c.l.b16 %v943
    %v1282 = vunpack.c.h.b16 %v943
    %v1283 = vunpack.c.l.b16 %v944
    %v1284 = vunpack.c.h.b16 %v944
    %v1285 = vunpack.c.l.b16 %v945
    %v1286 = vunpack.c.h.b16 %v945
    %v1287 = vunpack.c.l.b16 %v946
    %v1288 = vunpack.c.h.b16 %v946
    %v1289 = vunpack.c.l.b16 %v947
    %v1290 = vunpack.c.h.b16 %v947
    %v1291 = vunpack.c.l.b16 %v948
    %v1292 = vunpack.c.h.b16 %v948
    %v1293 = vunpack.c.l.b16 %v949
    %v1294 = vunpack.c.h.b16 %v949
    %v1295 = vunpack.c.l.b16 %v950
    %v1296 = vunpack.c.h.b16 %v950
    %v1297 = vunpack.c.l.b16 %v951
    %v1298 = vunpack.c.h.b16 %v951
    %v1299 = vunpack.c.l.b16 %v952
    %v1300 = vunpack.c.h.b16 %v952
    %v1301 = vunpack.c.l.b16 %v953
    %v1302 = vunpack.c.h.b16 %v953
    %v1303 = vunpack.c.l.b16 %v954
    %v1304 = vunpack.c.h.b16 %v954
    %v1305 = vunpack.c.l.b16 %v955
    %v1306 = vunpack.c.h.b16 %v955
    %v1307 = vunpack.c.l.b16 %v956
    %v1308 = vunpack.c.h.b16 %v956
    %v1309 = vunpack.c.l.b16 %v957
    %v1310 = vunpack.c.h.b16 %v957
    %v1311 = vunpack.c.l.b16 %v958
    %v1312 = vunpack.c.h.b16 %v958
    %v1313 = vunpack.c.l.b16 %v959
    %v1314 = vunpack.c.h.b16 %v959
    %v1315 = vunpack.c.l.b16 %v960
    %v1316 = vunpack.c.h.b16 %v960
    %v1317 = vunpack.c.l.b16 %v961
    %v1318 = vunpack.c.h.b16 %v961
    %v1319 = vunpack.c.l.b16 %v962
    %v1320 = vunpack.c.h.b16 %v962
    %v1321 = vunpack.c.l.b16 %v963
    %v1322 = vunpack.c.h.b16 %v963
    %v1323 = vunpack.c.l.b16 %v964
    %v1324 = vunpack.c.h.b16 %v964
    %v1325 = vunpack.c.l.b16 %v965
    %v1326 = vunpack.c.h.b16 %v965
    %v1327 = vunpack.c.l.b16 %v966
    %v1328 = vunpack.c.h.b16 %v966
    %v1329 = vunpack.c.l.b16 %v967
    %v1330 = vunpack.c.h.b16 %v967
    %v1331 = vunpack.c.l.b16 %v968
    %v1332 = vunpack.c.h.b16 %v968
    %v1333 = vunpack.c.l.b16 %v969
    %v1334 = vunpack.c.h.b16 %v969
    %v1335 = vunpack.c.l.b16 %v970
    %v1336 = vunpack.c.h.b16 %v970
    %v1337 = vunpack.c.l.b16 %v971
    %v1338 = vunpack.c.h.b16 %v971
    %v1339 = vunpack.c.l.b16 %v972
    %v1340 = vunpack.c.h.b16 %v972
    %v1341 = vunpack.c.l.b16 %v973
    %v1342 = vunpack.c.h.b16 %v973
    %v1343 = vunpack.c.l.b16 %v974
    %v1344 = vunpack.c.h.b16 %v974
    %v1345 = vunpack.c.l.b16 %v975
    %v1346 = vunpack.c.h.b16 %v975
    %v1347 = vunpack.c.l.b16 %v976
    %v1348 = vunpack.c.h.b16 %v976
    %v1349 = vunpack.c.l.b16 %v977
    %v1350 = vunpack.c.h.b16 %v977
    %v1351 = vunpack.c.l.b16 %v978
    %v1352 = vunpack.c.h.b16 %v978
    %v1353 = vunpack.c.l.b16 %v979
    %v1354 = vunpack.c.h.b16 %v979
    %v1355 = vunpack.c.l.b16 %v980
    %v1356 = vunpack.c.h.b16 %v980
    %v1357 = vunpack.c.l.b16 %v981
    %v1358 = vunpack.c.h.b16 %v981
    %v1359 = vunpack.c.l.b16 %v982
    %v1360 = vunpack.c.h.b16 %v982
    %v1361 = vunpack.c.l.b16 %v983
    %v1362 = vunpack.c.h.b16 %v983
    %v1363 = vunpack.c.l.b16 %v984
    %v1364 = vunpack.c.h.b16 %v984
    %v1365 = vunpack.c.l.b16 %v985
    %v1366 = vunpack.c.h.b16 %v985
    %v1367 = vunpack.c.l.b16 %v986
    %v1368 = vunpack.c.h.b16 %v986
    %v1369 = vunpack.c.l.b16 %v987
    %v1370 = vunpack.c.h.b16 %v987
    %v1371 = vunpack.c.l.b16 %v988
    %v1372 = vunpack.c.h.b16 %v988
    %v1373 = vunpack.c.l.b16 %v989
    %v1374 = vunpack.c.h.b16 %v989
    %v1375 = vunpack.c.l.b16 %v990
    %v1376 = vunpack.c.h.b16 %v990
    %v1377 = vunpack.c.l.b16 %v991
    %v1378 = vunpack.c.h.b16 %v991
    %v1379 = vunpack.c.l.b16 %v992
    %v1380 = vunpack.c.h.b16 %v992
    %v1381 = vunpack.c.l.b16 %v993
    %v1382 = vunpack.c.h.b16 %v993
    %v1383 = vunpack.c.l.b16 %v994
    %v1384 = vunpack.c.h.b16 %v994
    %v1385 = vunpack.c.l.b16 %v995
    %v1386 = vunpack.c.h.b16 %v995
    %v1387 = vunpack.c.l.b16 %v996
    %v1388 = vunpack.c.h.b16 %v996
    %v1389 = vunpack.c.l.b16 %v997
    %v1390 = vunpack.c.h.b16 %v997
    %v1391 = vunpack.c.l.b16 %v998
    %v1392 = vunpack.c.h.b16 %v998
    %v1393 = vunpack.c.l.b16 %v999
    %v1394 = vunpack.c.h.b16 %v999
    %v1395 = vunpack.c.l.b16 %v1000
    %v1396 = vunpack.c.h.b16 %v1000
    %v1397 = vunpack.c.l.b16 %v1001
    %v1398 = vunpack.c.h.b16 %v1001
    %v1399 = vunpack.c.l.b16 %v1002
    %v1400 = vunpack.c.h.b16 %v1002
    %v1401 = vunpack.c.l.b16 %v1003
    %v1402 = vunpack.c.h.b16 %v1003
    %v1403 = vunpack.c.l.b16 %v1004
    %v1404 = vunpack.c.h.b16 %v1004
    %v1405 = vunpack.c.l.b16 %v1005
    %v1406 = vunpack.c.h.b16 %v1005
    %v1407 = vunpack.c.l.b16 %v1006
    %v1408 = vunpack.c.h.b16 %v1006
    %v1409 = vunpack.c.l.b16 %v1007
    %v1410 = vunpack.c.h.b16 %v1007
    %v1411 = vunpack.c.l.b16 %v1008
    %v1412 = vunpack.c.h.b16 %v1008
    %v1413 = vunpack.c.l.b16 %v1009
    %v1414 = vunpack.c.h.b16 %v1009
    %v1415 = vunpack.c.l.b16 %v1010
    %v1416 = vunpack.c.h.b16 %v1010
    %v1417 = vpack.c.b16 %v1165, %v1161
    %v1418 = vpack.c.b16 %v1166, %v1162
    %v1419 = vpack.c.b16 %v1167, %v1163
    %v1420 = vpack.c.b16 %v1168, %v1164
    %v1421 = vpack.c.b16 %v1173, %v1169
    %v1422 = vpack.c.b16 %v1174, %v1170
    %v1423 = vpack.c.b16 %v1175, %v1171
    %v1424 = vpack.c.b16 %v1176, %v1172
    %v1425 = vpack.c.b16 %v1181, %v1177
    %v1426 = vpack.c.b16 %v1182, %v1178
    %v1427 = vpack.c.b16 %v1183, %v1179
    %v1428 = vpack.c.b16 %v1184, %v1180
    %v1429 = vpack.c.b16 %v1189, %v1185
    %v1430 = vpack.c.b16 %v1190, %v1186
    %v1431 = vpack.c.b16 %v1191, %v1187
    %v1432 = vpack.c.b16 %v1192, %v1188
    %v1433 = vpack.c.b16 %v1197, %v1193
    %v1434 = vpack.c.b16 %v1198, %v1194
    %v1435 = vpack.c.b16 %v1199, %v1195
    %v1436 = vpack.c.b16 %v1200, %v1196
    %v1437 = vpack.c.b16 %v1205, %v1201
    %v1438 = vpack.c.b16 %v1206, %v1202
    %v1439 = vpack.c.b16 %v1207, %v1203
    %v1440 = vpack.c.b16 %v1208, %v1204
    %v1441 = vpack.c.b16 %v1213, %v1209
    %v1442 = vpack.c.b16 %v1214, %v1210
    %v1443 = vpack.c.b16 %v1215, %v1211
    %v1444 = vpack.c.b16 %v1216, %v1212
    %v1445 = vpack.c.b16 %v1221, %v1217
    %v1446 = vpack.c.b16 %v1222, %v1218
    %v1447 = vpack.c.b16 %v1223, %v1219
    %v1448 = vpack.c.b16 %v1224, %v1220
    %v1449 = vpack.c.b16 %v1229, %v1225
    %v1450 = vpack.c.b16 %v1230, %v1226
    %v1451 = vpack.c.b16 %v1231, %v1227
    %v1452 = vpack.c.b16 %v1232, %v1228
    %v1453 = vpack.c.b16 %v1237, %v1233
    %v1454 = vpack.c.b16 %v1238, %v1234
    %v1455 = vpack.c.b16 %v1239, %v1235
    %v1456 = vpack.c.b16 %v1240, %v1236
    %v1457 = vpack.c.b16 %v1245, %v1241
    %v1458 = vpack.c.b16 %v1246, %v1242
    %v1459 = vpack.c.b16 %v1247, %v1243
    %v1460 = vpack.c.b16 %v1248, %v1244
    %v1461 = vpack.c.b16 %v1253, %v1249
    %v1462 = vpack.c.b16 %v1254, %v1250
    %v1463 = vpack.c.b16 %v1255, %v1251
    %v1464 = vpack.c.b16 %v1256, %v1252
    %v1465 = vpack.c.b16 %v1261, %v1257
    %v1466 = vpack.c.b16 %v1262, %v1258
    %v1467 = vpack.c.b16 %v1263, %v1259
    %v1468 = vpack.c.b16 %v1264, %v1260
    %v1469 = vpack.c.b16 %v1269, %v1265
    %v1470 = vpack.c.b16 %v1270, %v1266
    %v1471 = vpack.c.b16 %v1271, %v1267
    %v1472 = vpack.c.b16 %v1272, %v1268
    %v1473 = vpack.c.b16 %v1277, %v1273
    %v1474 = vpack.c.b16 %v1278, %v1274
    %v1475 = vpack.c.b16 %v1279, %v1275
    %v1476 = vpack.c.b16 %v1280, %v1276
    %v1477 = vpack.c.b16 %v1285, %v1281
    %v1478 = vpack.c.b16 %v1286, %v1282
    %v1479 = vpack.c.b16 %v1287, %v1283
    %v1480 = vpack.c.b16 %v1288, %v1284
    %v1481 = vpack.c.b16 %v1293, %v1289
    %v1482 = vpack.c.b16 %v1294, %v1290
    %v1483 = vpack.c.b16 %v1295, %v1291
    %v1484 = vpack.c.b16 %v1296, %v1292
    %v1485 = vpack.c.b16 %v1301, %v1297
    %v1486 = vpack.c.b16 %v1302, %v1298
    %v1487 = vpack.c.b16 %v1303, %v1299
    %v1488 = vpack.c.b16 %v1304, %v1300
    %v1489 = vpack.c.b16 %v1309, %v1305
    %v1490 = vpack.c.b16 %v1310, %v1306
    %v1491 = vpack.c.b16 %v1311, %v1307
    %v1492 = vpack.c.b16 %v1312, %v1308
    %v1493 = vpack.c.b16 %v1317, %v1313
    %v1494 = vpack.c.b16 %v1318, %v1314
    %v1495 = vpack.c.b16 %v1319, %v1315
    %v1496 = vpack.c.b16 %v1320, %v1316
    %v1497 = vpack.c.b16 %v1325, %v1321
    %v1498 = vpack.c.b16 %v1326, %v1322
    %v1499 = vpack.c.b16 %v1327, %v1323
    %v1500 = vpack.c.b16 %v1328, %v1324
    %v1501 = vpack.c.b16 %v1333, %v1329
    %v1502 = vpack.c.b16 %v1334, %v1330
    %v1503 = vpack.c.b16 %v1335, %v1331
    %v1504 = vpack.c.b16 %v1336, %v1332
    %v1505 = vpack.c.b16 %v1341, %v1337
    %v1506 = vpack.c.b16 %v1342, %v1338
    %v1507 = vpack.c.b16 %v1343, %v1339
    %v1508 = vpack.c.b16 %v1344, %v1340
    %v1509 = vpack.c.b16 %v1349, %v1345
    %v1510 = vpack.c.b16 %v1350, %v1346
    %v1511 = vpack.c.b16 %v1351, %v1347
    %v1512 = vpack.c.b16 %v1352, %v1348
    %v1513 = vpack.c.b16 %v1357, %v1353
    %v1514 = vpack.c.b16 %v1358, %v1354
    %v1515 = vpack.c.b16 %v1359, %v1355
    %v1516 = vpack.c.b16 %v1360, %v1356
    %v1517 = vpack.c.b16 %v1365, %v1361
    %v1518 = vpack.c.b16 %v1366, %v1362
    %v1519 = vpack.c.b16 %v1367, %v1363
    %v1520 = vpack.c.b16 %v1368, %v1364
    %v1521 = vpack.c.b16 %v1373, %v1369
    %v1522 = vpack.c.b16 %v1374, %v1370
    %v1523 = vpack.c.b16 %v1375, %v1371
    %v1524 = vpack.c.b16 %v1376, %v1372
    %v1525 = vpack.c.b16 %v1381, %v1377
    %v1526 = vpack.c.b16 %v1382, %v1378
    %v1527 = vpack.c.b16 %v1383, %v1379
    %v1528 = vpack.c.b16 %v1384, %v1380
    %v1529 = vpack.c.b16 %v1389, %v1385
    %v1530 = vpack.c.b16 %v1390, %v1386
    %v1531 = vpack.c.b16 %v1391, %v1387
    %v1532 = vpack.c.b16 %v1392, %v1388
    %v1533 = vpack.c.b16 %v1397, %v1393
    %v1534 = vpack.c.b16 %v1398, %v1394
    %v1535 = vpack.c.b16 %v1399, %v1395
    %v1536 = vpack.c.b16 %v1400, %v1396
    %v1537 = vpack.c.b16 %v1405, %v1401
    %v1538 = vpack.c.b16 %v1406, %v1402
    %v1539 = vpack.c.b16 %v1407, %v1403
    %v1540 = vpack.c.b16 %v1408, %v1404
    %v1541 = vpack.c.b16 %v1413, %v1409
    %v1542 = vpack.c.b16 %v1414, %v1410
    %v1543 = vpack.c.b16 %v1415, %v1411
    %v1544 = vpack.c.b16 %v1416, %v1412
    %1673 = vmatprep.subr.bf16.mxu0 %v1418
    %1674 = vmatpush1.bf16.msra.mxu0 %v1417
    %1675 = vmatprep.subr.bf16.mxu0 %v1422
    %1676 = vmatpush1.bf16.msra.mxu0 %v1421
    %1677 = vmatprep.subr.bf16.mxu0 %v1426
    %1678 = vmatpush1.bf16.msra.mxu0 %v1425
    %1679 = vmatprep.subr.bf16.mxu0 %v1430
    %1680 = vmatpush1.bf16.msra.mxu0 %v1429
    %1681 = vmatprep.subr.bf16.mxu0 %v1434
    %1682 = vmatpush1.bf16.msra.mxu0 %v1433
    %1683 = vmatprep.subr.bf16.mxu0 %v1438
    %1684 = vmatpush1.bf16.msra.mxu0 %v1437
    %1685 = vmatprep.subr.bf16.mxu0 %v1442
    %1686 = vmatpush1.bf16.msra.mxu0 %v1441
    %1687 = vmatprep.subr.bf16.mxu0 %v1446
    %1688 = vmatpush1.bf16.msra.mxu0 %v1445
    %1689 = vmatprep.subr.bf16.mxu0 %v1450
    %1690 = vmatpush1.bf16.msra.mxu0 %v1449
    %1691 = vmatprep.subr.bf16.mxu0 %v1454
    %1692 = vmatpush1.bf16.msra.mxu0 %v1453
    %1693 = vmatprep.subr.bf16.mxu0 %v1458
    %1694 = vmatpush1.bf16.msra.mxu0 %v1457
    %1695 = vmatprep.subr.bf16.mxu0 %v1462
    %1696 = vmatpush1.bf16.msra.mxu0 %v1461
    %1697 = vmatprep.subr.bf16.mxu0 %v1466
    %1698 = vmatpush1.bf16.msra.mxu0 %v1465
    %1699 = vmatprep.subr.bf16.mxu0 %v1470
    %1700 = vmatpush1.bf16.msra.mxu0 %v1469
    %1701 = vmatprep.subr.bf16.mxu0 %v1474
    %1702 = vmatpush1.bf16.msra.mxu0 %v1473
    %1703 = vmatprep.subr.bf16.mxu0 %v1478
    %1704 = vmatpush1.bf16.msra.mxu0 %v1477
    %1705 = vmatprep.mubr.bf16.mxu0 %v880
    %1706 = vmatmul.mubr.bf16.gmra.mrb[0].mxu0 %v879
    %v1707 = vpop.f32.mrb[0].mxu0
    %v1708 = vadd.f32 %v1016, %v1707
    %v1709 = vpop.f32.mrb[0].mxu0
    %v1710 = vadd.f32 %v1020, %v1709
    %v1711 = vpop.f32.mrb[0].mxu0
    %v1712 = vpop.f32.mrb[0].mxu0
    %1713 = vdwg.mxu0
    %1714 = vmatprep.subr.bf16.mxu0 %v1482
    %1715 = vmatpush1.bf16.msra.mxu0 %v1481
    %1716 = vmatprep.subr.bf16.mxu0 %v1486
    %1717 = vmatpush1.bf16.msra.mxu0 %v1485
    %1718 = vmatprep.subr.bf16.mxu0 %v1490
    %1719 = vmatpush1.bf16.msra.mxu0 %v1489
    %1720 = vmatprep.subr.bf16.mxu0 %v1494
    %1721 = vmatpush1.bf16.msra.mxu0 %v1493
    %1722 = vmatprep.subr.bf16.mxu0 %v1498
    %1723 = vmatpush1.bf16.msra.mxu0 %v1497
    %1724 = vmatprep.subr.bf16.mxu0 %v1502
    %1725 = vmatpush1.bf16.msra.mxu0 %v1501
    %1726 = vmatprep.subr.bf16.mxu0 %v1506
    %1727 = vmatpush1.bf16.msra.mxu0 %v1505
    %1728 = vmatprep.subr.bf16.mxu0 %v1510
    %1729 = vmatpush1.bf16.msra.mxu0 %v1509
    %1730 = vmatprep.subr.bf16.mxu0 %v1514
    %1731 = vmatpush1.bf16.msra.mxu0 %v1513
    %1732 = vmatprep.subr.bf16.mxu0 %v1518
    %1733 = vmatpush1.bf16.msra.mxu0 %v1517
    %1734 = vmatprep.subr.bf16.mxu0 %v1522
    %1735 = vmatpush1.bf16.msra.mxu0 %v1521
    %1736 = vmatprep.subr.bf16.mxu0 %v1526
    %1737 = vmatpush1.bf16.msra.mxu0 %v1525
    %1738 = vmatprep.subr.bf16.mxu0 %v1530
    %1739 = vmatpush1.bf16.msra.mxu0 %v1529
    %1740 = vmatprep.subr.bf16.mxu0 %v1534
    %1741 = vmatpush1.bf16.msra.mxu0 %v1533
    %1742 = vmatprep.subr.bf16.mxu0 %v1538
    %1743 = vmatpush1.bf16.msra.mxu0 %v1537
    %1744 = vmatprep.subr.bf16.mxu0 %v1542
    %1745 = vmatpush1.bf16.msra.mxu0 %v1541
    %1746 = vmatprep.mubr.bf16.mxu0 %v882
    %1747 = vmatmul.mubr.bf16.gmra.mrb[0].mxu0 %v881
    %v1748 = vpop.f32.mrb[0].mxu0
    %v1749 = vadd.f32 %v1708, %v1748
    %v1750 = vpop.f32.mrb[0].mxu0
    %v1751 = vadd.f32 %v1710, %v1750
    %v1752 = vpop.f32.mrb[0].mxu0
    %v1753 = vpop.f32.mrb[0].mxu0
    %1754 = vdwg.mxu0
    %1755 = vmatprep.subr.bf16.mxu0 %v1420
    %1756 = vmatpush1.bf16.msra.mxu0 %v1419
    %1757 = vmatprep.subr.bf16.mxu0 %v1424
    %1758 = vmatpush1.bf16.msra.mxu0 %v1423
    %1759 = vmatprep.subr.bf16.mxu0 %v1428
    %1760 = vmatpush1.bf16.msra.mxu0 %v1427
    %1761 = vmatprep.subr.bf16.mxu0 %v1432
    %1762 = vmatpush1.bf16.msra.mxu0 %v1431
    %1763 = vmatprep.subr.bf16.mxu0 %v1436
    %1764 = vmatpush1.bf16.msra.mxu0 %v1435
    %1765 = vmatprep.subr.bf16.mxu0 %v1440
    %1766 = vmatpush1.bf16.msra.mxu0 %v1439
    %1767 = vmatprep.subr.bf16.mxu0 %v1444
    %1768 = vmatpush1.bf16.msra.mxu0 %v1443
    %1769 = vmatprep.subr.bf16.mxu0 %v1448
    %1770 = vmatpush1.bf16.msra.mxu0 %v1447
    %1771 = vmatprep.subr.bf16.mxu0 %v1452
    %1772 = vmatpush1.bf16.msra.mxu0 %v1451
    %1773 = vmatprep.subr.bf16.mxu0 %v1456
    %1774 = vmatpush1.bf16.msra.mxu0 %v1455
    %1775 = vmatprep.subr.bf16.mxu0 %v1460
    %1776 = vmatpush1.bf16.msra.mxu0 %v1459
    %1777 = vmatprep.subr.bf16.mxu0 %v1464
    %1778 = vmatpush1.bf16.msra.mxu0 %v1463
    %1779 = vmatprep.subr.bf16.mxu0 %v1468
    %1780 = vmatpush1.bf16.msra.mxu0 %v1467
    %1781 = vmatprep.subr.bf16.mxu0 %v1472
    %1782 = vmatpush1.bf16.msra.mxu0 %v1471
    %1783 = vmatprep.subr.bf16.mxu0 %v1476
    %1784 = vmatpush1.bf16.msra.mxu0 %v1475
    %1785 = vmatprep.subr.bf16.mxu0 %v1480
    %1786 = vmatpush1.bf16.msra.mxu0 %v1479
    %1787 = vmatprep.mubr.bf16.mxu0 %v880
    %1788 = vmatmul.mubr.bf16.gmra.mrb[0].mxu0 %v879
    %v1789 = vpop.f32.mrb[0].mxu0
    %v1790 = vadd.f32 %v1024, %v1789
    %v1791 = vpop.f32.mrb[0].mxu0
    %v1792 = vadd.f32 %v1028, %v1791
    %v1793 = vpop.f32.mrb[0].mxu0
    %v1794 = vpop.f32.mrb[0].mxu0
    %1795 = vdwg.mxu0
    %1796 = vmatprep.subr.bf16.mxu0 %v1484
    %1797 = vmatpush1.bf16.msra.mxu0 %v1483
    %1798 = vmatprep.subr.bf16.mxu0 %v1488
    %1799 = vmatpush1.bf16.msra.mxu0 %v1487
    %1800 = vmatprep.subr.bf16.mxu0 %v1492
    %1801 = vmatpush1.bf16.msra.mxu0 %v1491
    %1802 = vmatprep.subr.bf16.mxu0 %v1496
    %1803 = vmatpush1.bf16.msra.mxu0 %v1495
    %1804 = vmatprep.subr.bf16.mxu0 %v1500
    %1805 = vmatpush1.bf16.msra.mxu0 %v1499
    %1806 = vmatprep.subr.bf16.mxu0 %v1504
    %1807 = vmatpush1.bf16.msra.mxu0 %v1503
    %1808 = vmatprep.subr.bf16.mxu0 %v1508
    %1809 = vmatpush1.bf16.msra.mxu0 %v1507
    %1810 = vmatprep.subr.bf16.mxu0 %v1512
    %1811 = vmatpush1.bf16.msra.mxu0 %v1511
    %1812 = vmatprep.subr.bf16.mxu0 %v1516
    %1813 = vmatpush1.bf16.msra.mxu0 %v1515
    %1814 = vmatprep.subr.bf16.mxu0 %v1520
    %1815 = vmatpush1.bf16.msra.mxu0 %v1519
    %1816 = vmatprep.subr.bf16.mxu0 %v1524
    %1817 = vmatpush1.bf16.msra.mxu0 %v1523
    %1818 = vmatprep.subr.bf16.mxu0 %v1528
    %1819 = vmatpush1.bf16.msra.mxu0 %v1527
    %1820 = vmatprep.subr.bf16.mxu0 %v1532
    %1821 = vmatpush1.bf16.msra.mxu0 %v1531
    %1822 = vmatprep.subr.bf16.mxu0 %v1536
    %1823 = vmatpush1.bf16.msra.mxu0 %v1535
    %1824 = vmatprep.subr.bf16.mxu0 %v1540
    %1825 = vmatpush1.bf16.msra.mxu0 %v1539
    %1826 = vmatprep.subr.bf16.mxu0 %v1544
    %1827 = vmatpush1.bf16.msra.mxu0 %v1543
    %1828 = vmatprep.mubr.bf16.mxu0 %v882
    %1829 = vmatmul.mubr.bf16.gmra.mrb[0].mxu0 %v881
    %v1830 = vpop.f32.mrb[0].mxu0
    %v1831 = vadd.f32 %v1790, %v1830
    %v1832 = vpop.f32.mrb[0].mxu0
    %v1833 = vadd.f32 %v1792, %v1832
    %v1834 = vpop.f32.mrb[0].mxu0
    %v1835 = vpop.f32.mrb[0].mxu0
    %1836 = vdwg.mxu0
    %v1837 = vmul.f32 %v1749, 0.2
    %v1838 = vmul.f32 %v1751, 0.2
    %v1839 = vmul.f32 %v1831, 0.2
    %v1840 = vmul.f32 %v1833, 0.2
    %v1841 = vmax.f32 %v1749, %v1837
    %v1842 = vmax.f32 %v1751, %v1838
    %v1843 = vmax.f32 %v1831, %v1839
    %v1844 = vmax.f32 %v1833, %v1840
    %v1845 = vpack.c.bf16 %v1841, %v1841
    %v1846 = vpack.c.bf16 %v1842, %v1842
    %v1847 = vpack.c.bf16 %v1843, %v1843
    %v1848 = vpack.c.bf16 %v1844, %v1844
    %v1849 = vld [vmem:[#allocation8] sm:$0xff]
    %v1850 = vld [vmem:[#allocation8 + $0x8] sm:$0xff]
    %v1851 = vld [vmem:[#allocation8 + $0x10] sm:$0xff]
    %v1852 = vld [vmem:[#allocation8 + $0x18] sm:$0xff]
    %v1853 = vld [vmem:[#allocation8 + $0x20] sm:$0xff]
    %v1854 = vld [vmem:[#allocation8 + $0x28] sm:$0xff]
    %v1855 = vld [vmem:[#allocation8 + $0x30] sm:$0xff]
    %v1856 = vld [vmem:[#allocation8 + $0x38] sm:$0xff]
    %v1857 = vld [vmem:[#allocation8 + $0x40] sm:$0xff]
    %v1858 = vld [vmem:[#allocation8 + $0x48] sm:$0xff]
    %v1859 = vld [vmem:[#allocation8 + $0x50] sm:$0xff]
    %v1860 = vld [vmem:[#allocation8 + $0x58] sm:$0xff]
    %v1861 = vld [vmem:[#allocation8 + $0x60] sm:$0xff]
    %v1862 = vld [vmem:[#allocation8 + $0x68] sm:$0xff]
    %v1863 = vld [vmem:[#allocation8 + $0x70] sm:$0xff]
    %v1864 = vld [vmem:[#allocation8 + $0x78] sm:$0xff]
    %v1865 = vld [vmem:[#allocation8 + $0x80] sm:$0xff]
    %v1866 = vld [vmem:[#allocation8 + $0x88] sm:$0xff]
    %v1867 = vld [vmem:[#allocation8 + $0x90] sm:$0xff]
    %v1868 = vld [vmem:[#allocation8 + $0x98] sm:$0xff]
    %v1869 = vld [vmem:[#allocation8 + $0xa0] sm:$0xff]
    %v1870 = vld [vmem:[#allocation8 + $0xa8] sm:$0xff]
    %v1871 = vld [vmem:[#allocation8 + $0xb0] sm:$0xff]
    %v1872 = vld [vmem:[#allocation8 + $0xb8] sm:$0xff]
    %v1873 = vld [vmem:[#allocation8 + $0xc0] sm:$0xff]
    %v1874 = vld [vmem:[#allocation8 + $0xc8] sm:$0xff]
    %v1875 = vld [vmem:[#allocation8 + $0xd0] sm:$0xff]
    %v1876 = vld [vmem:[#allocation8 + $0xd8] sm:$0xff]
    %v1877 = vld [vmem:[#allocation8 + $0xe0] sm:$0xff]
    %v1878 = vld [vmem:[#allocation8 + $0xe8] sm:$0xff]
    %v1879 = vld [vmem:[#allocation8 + $0xf0] sm:$0xff]
    %v1880 = vld [vmem:[#allocation8 + $0xf8] sm:$0xff]
    %v1881 = vld [vmem:[#allocation8 + $0x100] sm:$0xff]
    %v1882 = vld [vmem:[#allocation8 + $0x108] sm:$0xff]
    %v1883 = vld [vmem:[#allocation8 + $0x110] sm:$0xff]
    %v1884 = vld [vmem:[#allocation8 + $0x118] sm:$0xff]
    %v1885 = vld [vmem:[#allocation8 + $0x120] sm:$0xff]
    %v1886 = vld [vmem:[#allocation8 + $0x128] sm:$0xff]
    %v1887 = vld [vmem:[#allocation8 + $0x130] sm:$0xff]
    %v1888 = vld [vmem:[#allocation8 + $0x138] sm:$0xff]
    %v1889 = vld [vmem:[#allocation8 + $0x140] sm:$0xff]
    %v1890 = vld [vmem:[#allocation8 + $0x148] sm:$0xff]
    %v1891 = vld [vmem:[#allocation8 + $0x150] sm:$0xff]
    %v1892 = vld [vmem:[#allocation8 + $0x158] sm:$0xff]
    %v1893 = vld [vmem:[#allocation8 + $0x160] sm:$0xff]
    %v1894 = vld [vmem:[#allocation8 + $0x168] sm:$0xff]
    %v1895 = vld [vmem:[#allocation8 + $0x170] sm:$0xff]
    %v1896 = vld [vmem:[#allocation8 + $0x178] sm:$0xff]
    %v1897 = vld [vmem:[#allocation8 + $0x180] sm:$0xff]
    %v1898 = vld [vmem:[#allocation8 + $0x188] sm:$0xff]
    %v1899 = vld [vmem:[#allocation8 + $0x190] sm:$0xff]
    %v1900 = vld [vmem:[#allocation8 + $0x198] sm:$0xff]
    %v1901 = vld [vmem:[#allocation8 + $0x1a0] sm:$0xff]
    %v1902 = vld [vmem:[#allocation8 + $0x1a8] sm:$0xff]
    %v1903 = vld [vmem:[#allocation8 + $0x1b0] sm:$0xff]
    %v1904 = vld [vmem:[#allocation8 + $0x1b8] sm:$0xff]
    %v1905 = vld [vmem:[#allocation8 + $0x1c0] sm:$0xff]
    %v1906 = vld [vmem:[#allocation8 + $0x1c8] sm:$0xff]
    %v1907 = vld [vmem:[#allocation8 + $0x1d0] sm:$0xff]
    %v1908 = vld [vmem:[#allocation8 + $0x1d8] sm:$0xff]
    %v1909 = vld [vmem:[#allocation8 + $0x1e0] sm:$0xff]
    %v1910 = vld [vmem:[#allocation8 + $0x1e8] sm:$0xff]
    %v1911 = vld [vmem:[#allocation8 + $0x1f0] sm:$0xff]
    %v1912 = vld [vmem:[#allocation8 + $0x1f8] sm:$0xff]
    %v1913 = vld [vmem:[#allocation8 + $0x200] sm:$0xff]
    %v1914 = vld [vmem:[#allocation8 + $0x208] sm:$0xff]
    %v1915 = vld [vmem:[#allocation8 + $0x210] sm:$0xff]
    %v1916 = vld [vmem:[#allocation8 + $0x218] sm:$0xff]
    %v1917 = vld [vmem:[#allocation8 + $0x220] sm:$0xff]
    %v1918 = vld [vmem:[#allocation8 + $0x228] sm:$0xff]
    %v1919 = vld [vmem:[#allocation8 + $0x230] sm:$0xff]
    %v1920 = vld [vmem:[#allocation8 + $0x238] sm:$0xff]
    %v1921 = vld [vmem:[#allocation8 + $0x240] sm:$0xff]
    %v1922 = vld [vmem:[#allocation8 + $0x248] sm:$0xff]
    %v1923 = vld [vmem:[#allocation8 + $0x250] sm:$0xff]
    %v1924 = vld [vmem:[#allocation8 + $0x258] sm:$0xff]
    %v1925 = vld [vmem:[#allocation8 + $0x260] sm:$0xff]
    %v1926 = vld [vmem:[#allocation8 + $0x268] sm:$0xff]
    %v1927 = vld [vmem:[#allocation8 + $0x270] sm:$0xff]
    %v1928 = vld [vmem:[#allocation8 + $0x278] sm:$0xff]
    %v1929 = vld [vmem:[#allocation8 + $0x280] sm:$0xff]
    %v1930 = vld [vmem:[#allocation8 + $0x288] sm:$0xff]
    %v1931 = vld [vmem:[#allocation8 + $0x290] sm:$0xff]
    %v1932 = vld [vmem:[#allocation8 + $0x298] sm:$0xff]
    %v1933 = vld [vmem:[#allocation8 + $0x2a0] sm:$0xff]
    %v1934 = vld [vmem:[#allocation8 + $0x2a8] sm:$0xff]
    %v1935 = vld [vmem:[#allocation8 + $0x2b0] sm:$0xff]
    %v1936 = vld [vmem:[#allocation8 + $0x2b8] sm:$0xff]
    %v1937 = vld [vmem:[#allocation8 + $0x2c0] sm:$0xff]
    %v1938 = vld [vmem:[#allocation8 + $0x2c8] sm:$0xff]
    %v1939 = vld [vmem:[#allocation8 + $0x2d0] sm:$0xff]
    %v1940 = vld [vmem:[#allocation8 + $0x2d8] sm:$0xff]
    %v1941 = vld [vmem:[#allocation8 + $0x2e0] sm:$0xff]
    %v1942 = vld [vmem:[#allocation8 + $0x2e8] sm:$0xff]
    %v1943 = vld [vmem:[#allocation8 + $0x2f0] sm:$0xff]
    %v1944 = vld [vmem:[#allocation8 + $0x2f8] sm:$0xff]
    %v1945 = vld [vmem:[#allocation8 + $0x300] sm:$0xff]
    %v1946 = vld [vmem:[#allocation8 + $0x308] sm:$0xff]
    %v1947 = vld [vmem:[#allocation8 + $0x310] sm:$0xff]
    %v1948 = vld [vmem:[#allocation8 + $0x318] sm:$0xff]
    %v1949 = vld [vmem:[#allocation8 + $0x320] sm:$0xff]
    %v1950 = vld [vmem:[#allocation8 + $0x328] sm:$0xff]
    %v1951 = vld [vmem:[#allocation8 + $0x330] sm:$0xff]
    %v1952 = vld [vmem:[#allocation8 + $0x338] sm:$0xff]
    %v1953 = vld [vmem:[#allocation8 + $0x340] sm:$0xff]
    %v1954 = vld [vmem:[#allocation8 + $0x348] sm:$0xff]
    %v1955 = vld [vmem:[#allocation8 + $0x350] sm:$0xff]
    %v1956 = vld [vmem:[#allocation8 + $0x358] sm:$0xff]
    %v1957 = vld [vmem:[#allocation8 + $0x360] sm:$0xff]
    %v1958 = vld [vmem:[#allocation8 + $0x368] sm:$0xff]
    %v1959 = vld [vmem:[#allocation8 + $0x370] sm:$0xff]
    %v1960 = vld [vmem:[#allocation8 + $0x378] sm:$0xff]
    %v1961 = vld [vmem:[#allocation8 + $0x380] sm:$0xff]
    %v1962 = vld [vmem:[#allocation8 + $0x388] sm:$0xff]
    %v1963 = vld [vmem:[#allocation8 + $0x390] sm:$0xff]
    %v1964 = vld [vmem:[#allocation8 + $0x398] sm:$0xff]
    %v1965 = vld [vmem:[#allocation8 + $0x3a0] sm:$0xff]
    %v1966 = vld [vmem:[#allocation8 + $0x3a8] sm:$0xff]
    %v1967 = vld [vmem:[#allocation8 + $0x3b0] sm:$0xff]
    %v1968 = vld [vmem:[#allocation8 + $0x3b8] sm:$0xff]
    %v1969 = vld [vmem:[#allocation8 + $0x3c0] sm:$0xff]
    %v1970 = vld [vmem:[#allocation8 + $0x3c8] sm:$0xff]
    %v1971 = vld [vmem:[#allocation8 + $0x3d0] sm:$0xff]
    %v1972 = vld [vmem:[#allocation8 + $0x3d8] sm:$0xff]
    %v1973 = vld [vmem:[#allocation8 + $0x3e0] sm:$0xff]
    %v1974 = vld [vmem:[#allocation8 + $0x3e8] sm:$0xff]
    %v1975 = vld [vmem:[#allocation8 + $0x3f0] sm:$0xff]
    %v1976 = vld [vmem:[#allocation8 + $0x3f8] sm:$0xff]
    %v1977 = vld [vmem:[%s9] sm:$0xf]
    %v1979 = vlaneseq
    %v1980 = vshrl.u32 %v1979, 7
    %v1981 = vsub.s32 0, %v1980
    %v1982 = vrot.slane %v1977, %v1981
    %v1983 = vlaneseq
    %v1984 = vshrl.u32 %v1983, 7
    %v1985 = vsub.s32 1, %v1984
    %v1986 = vrot.slane %v1977, %v1985
    %v1987 = vlaneseq
    %v1988 = vshrl.u32 %v1987, 7
    %v1989 = vsub.s32 2, %v1988
    %v1990 = vrot.slane %v1977, %v1989
    %v1991 = vlaneseq
    %v1992 = vshrl.u32 %v1991, 7
    %v1993 = vsub.s32 3, %v1992
    %v1994 = vrot.slane %v1977, %v1993
    %v2127 = vunpack.c.l.b16 %v1849
    %v2128 = vunpack.c.h.b16 %v1849
    %v2129 = vunpack.c.l.b16 %v1850
    %v2130 = vunpack.c.h.b16 %v1850
    %v2131 = vunpack.c.l.b16 %v1851
    %v2132 = vunpack.c.h.b16 %v1851
    %v2133 = vunpack.c.l.b16 %v1852
    %v2134 = vunpack.c.h.b16 %v1852
    %v2135 = vunpack.c.l.b16 %v1853
    %v2136 = vunpack.c.h.b16 %v1853
    %v2137 = vunpack.c.l.b16 %v1854
    %v2138 = vunpack.c.h.b16 %v1854
    %v2139 = vunpack.c.l.b16 %v1855
    %v2140 = vunpack.c.h.b16 %v1855
    %v2141 = vunpack.c.l.b16 %v1856
    %v2142 = vunpack.c.h.b16 %v1856
    %v2143 = vunpack.c.l.b16 %v1857
    %v2144 = vunpack.c.h.b16 %v1857
    %v2145 = vunpack.c.l.b16 %v1858
    %v2146 = vunpack.c.h.b16 %v1858
    %v2147 = vunpack.c.l.b16 %v1859
    %v2148 = vunpack.c.h.b16 %v1859
    %v2149 = vunpack.c.l.b16 %v1860
    %v2150 = vunpack.c.h.b16 %v1860
    %v2151 = vunpack.c.l.b16 %v1861
    %v2152 = vunpack.c.h.b16 %v1861
    %v2153 = vunpack.c.l.b16 %v1862
    %v2154 = vunpack.c.h.b16 %v1862
    %v2155 = vunpack.c.l.b16 %v1863
    %v2156 = vunpack.c.h.b16 %v1863
    %v2157 = vunpack.c.l.b16 %v1864
    %v2158 = vunpack.c.h.b16 %v1864
    %v2159 = vunpack.c.l.b16 %v1865
    %v2160 = vunpack.c.h.b16 %v1865
    %v2161 = vunpack.c.l.b16 %v1866
    %v2162 = vunpack.c.h.b16 %v1866
    %v2163 = vunpack.c.l.b16 %v1867
    %v2164 = vunpack.c.h.b16 %v1867
    %v2165 = vunpack.c.l.b16 %v1868
    %v2166 = vunpack.c.h.b16 %v1868
    %v2167 = vunpack.c.l.b16 %v1869
    %v2168 = vunpack.c.h.b16 %v1869
    %v2169 = vunpack.c.l.b16 %v1870
    %v2170 = vunpack.c.h.b16 %v1870
    %v2171 = vunpack.c.l.b16 %v1871
    %v2172 = vunpack.c.h.b16 %v1871
    %v2173 = vunpack.c.l.b16 %v1872
    %v2174 = vunpack.c.h.b16 %v1872
    %v2175 = vunpack.c.l.b16 %v1873
    %v2176 = vunpack.c.h.b16 %v1873
    %v2177 = vunpack.c.l.b16 %v1874
    %v2178 = vunpack.c.h.b16 %v1874
    %v2179 = vunpack.c.l.b16 %v1875
    %v2180 = vunpack.c.h.b16 %v1875
    %v2181 = vunpack.c.l.b16 %v1876
    %v2182 = vunpack.c.h.b16 %v1876
    %v2183 = vunpack.c.l.b16 %v1877
    %v2184 = vunpack.c.h.b16 %v1877
    %v2185 = vunpack.c.l.b16 %v1878
    %v2186 = vunpack.c.h.b16 %v1878
    %v2187 = vunpack.c.l.b16 %v1879
    %v2188 = vunpack.c.h.b16 %v1879
    %v2189 = vunpack.c.l.b16 %v1880
    %v2190 = vunpack.c.h.b16 %v1880
    %v2191 = vunpack.c.l.b16 %v1881
    %v2192 = vunpack.c.h.b16 %v1881
    %v2193 = vunpack.c.l.b16 %v1882
    %v2194 = vunpack.c.h.b16 %v1882
    %v2195 = vunpack.c.l.b16 %v1883
    %v2196 = vunpack.c.h.b16 %v1883
    %v2197 = vunpack.c.l.b16 %v1884
    %v2198 = vunpack.c.h.b16 %v1884
    %v2199 = vunpack.c.l.b16 %v1885
    %v2200 = vunpack.c.h.b16 %v1885
    %v2201 = vunpack.c.l.b16 %v1886
    %v2202 = vunpack.c.h.b16 %v1886
    %v2203 = vunpack.c.l.b16 %v1887
    %v2204 = vunpack.c.h.b16 %v1887
    %v2205 = vunpack.c.l.b16 %v1888
    %v2206 = vunpack.c.h.b16 %v1888
    %v2207 = vunpack.c.l.b16 %v1889
    %v2208 = vunpack.c.h.b16 %v1889
    %v2209 = vunpack.c.l.b16 %v1890
    %v2210 = vunpack.c.h.b16 %v1890
    %v2211 = vunpack.c.l.b16 %v1891
    %v2212 = vunpack.c.h.b16 %v1891
    %v2213 = vunpack.c.l.b16 %v1892
    %v2214 = vunpack.c.h.b16 %v1892
    %v2215 = vunpack.c.l.b16 %v1893
    %v2216 = vunpack.c.h.b16 %v1893
    %v2217 = vunpack.c.l.b16 %v1894
    %v2218 = vunpack.c.h.b16 %v1894
    %v2219 = vunpack.c.l.b16 %v1895
    %v2220 = vunpack.c.h.b16 %v1895
    %v2221 = vunpack.c.l.b16 %v1896
    %v2222 = vunpack.c.h.b16 %v1896
    %v2223 = vunpack.c.l.b16 %v1897
    %v2224 = vunpack.c.h.b16 %v1897
    %v2225 = vunpack.c.l.b16 %v1898
    %v2226 = vunpack.c.h.b16 %v1898
    %v2227 = vunpack.c.l.b16 %v1899
    %v2228 = vunpack.c.h.b16 %v1899
    %v2229 = vunpack.c.l.b16 %v1900
    %v2230 = vunpack.c.h.b16 %v1900
    %v2231 = vunpack.c.l.b16 %v1901
    %v2232 = vunpack.c.h.b16 %v1901
    %v2233 = vunpack.c.l.b16 %v1902
    %v2234 = vunpack.c.h.b16 %v1902
    %v2235 = vunpack.c.l.b16 %v1903
    %v2236 = vunpack.c.h.b16 %v1903
    %v2237 = vunpack.c.l.b16 %v1904
    %v2238 = vunpack.c.h.b16 %v1904
    %v2239 = vunpack.c.l.b16 %v1905
    %v2240 = vunpack.c.h.b16 %v1905
    %v2241 = vunpack.c.l.b16 %v1906
    %v2242 = vunpack.c.h.b16 %v1906
    %v2243 = vunpack.c.l.b16 %v1907
    %v2244 = vunpack.c.h.b16 %v1907
    %v2245 = vunpack.c.l.b16 %v1908
    %v2246 = vunpack.c.h.b16 %v1908
    %v2247 = vunpack.c.l.b16 %v1909
    %v2248 = vunpack.c.h.b16 %v1909
    %v2249 = vunpack.c.l.b16 %v1910
    %v2250 = vunpack.c.h.b16 %v1910
    %v2251 = vunpack.c.l.b16 %v1911
    %v2252 = vunpack.c.h.b16 %v1911
    %v2253 = vunpack.c.l.b16 %v1912
    %v2254 = vunpack.c.h.b16 %v1912
    %v2255 = vunpack.c.l.b16 %v1913
    %v2256 = vunpack.c.h.b16 %v1913
    %v2257 = vunpack.c.l.b16 %v1914
    %v2258 = vunpack.c.h.b16 %v1914
    %v2259 = vunpack.c.l.b16 %v1915
    %v2260 = vunpack.c.h.b16 %v1915
    %v2261 = vunpack.c.l.b16 %v1916
    %v2262 = vunpack.c.h.b16 %v1916
    %v2263 = vunpack.c.l.b16 %v1917
    %v2264 = vunpack.c.h.b16 %v1917
    %v2265 = vunpack.c.l.b16 %v1918
    %v2266 = vunpack.c.h.b16 %v1918
    %v2267 = vunpack.c.l.b16 %v1919
    %v2268 = vunpack.c.h.b16 %v1919
    %v2269 = vunpack.c.l.b16 %v1920
    %v2270 = vunpack.c.h.b16 %v1920
    %v2271 = vunpack.c.l.b16 %v1921
    %v2272 = vunpack.c.h.b16 %v1921
    %v2273 = vunpack.c.l.b16 %v1922
    %v2274 = vunpack.c.h.b16 %v1922
    %v2275 = vunpack.c.l.b16 %v1923
    %v2276 = vunpack.c.h.b16 %v1923
    %v2277 = vunpack.c.l.b16 %v1924
    %v2278 = vunpack.c.h.b16 %v1924
    %v2279 = vunpack.c.l.b16 %v1925
    %v2280 = vunpack.c.h.b16 %v1925
    %v2281 = vunpack.c.l.b16 %v1926
    %v2282 = vunpack.c.h.b16 %v1926
    %v2283 = vunpack.c.l.b16 %v1927
    %v2284 = vunpack.c.h.b16 %v1927
    %v2285 = vunpack.c.l.b16 %v1928
    %v2286 = vunpack.c.h.b16 %v1928
    %v2287 = vunpack.c.l.b16 %v1929
    %v2288 = vunpack.c.h.b16 %v1929
    %v2289 = vunpack.c.l.b16 %v1930
    %v2290 = vunpack.c.h.b16 %v1930
    %v2291 = vunpack.c.l.b16 %v1931
    %v2292 = vunpack.c.h.b16 %v1931
    %v2293 = vunpack.c.l.b16 %v1932
    %v2294 = vunpack.c.h.b16 %v1932
    %v2295 = vunpack.c.l.b16 %v1933
    %v2296 = vunpack.c.h.b16 %v1933
    %v2297 = vunpack.c.l.b16 %v1934
    %v2298 = vunpack.c.h.b16 %v1934
    %v2299 = vunpack.c.l.b16 %v1935
    %v2300 = vunpack.c.h.b16 %v1935
    %v2301 = vunpack.c.l.b16 %v1936
    %v2302 = vunpack.c.h.b16 %v1936
    %v2303 = vunpack.c.l.b16 %v1937
    %v2304 = vunpack.c.h.b16 %v1937
    %v2305 = vunpack.c.l.b16 %v1938
    %v2306 = vunpack.c.h.b16 %v1938
    %v2307 = vunpack.c.l.b16 %v1939
    %v2308 = vunpack.c.h.b16 %v1939
    %v2309 = vunpack.c.l.b16 %v1940
    %v2310 = vunpack.c.h.b16 %v1940
    %v2311 = vunpack.c.l.b16 %v1941
    %v2312 = vunpack.c.h.b16 %v1941
    %v2313 = vunpack.c.l.b16 %v1942
    %v2314 = vunpack.c.h.b16 %v1942
    %v2315 = vunpack.c.l.b16 %v1943
    %v2316 = vunpack.c.h.b16 %v1943
    %v2317 = vunpack.c.l.b16 %v1944
    %v2318 = vunpack.c.h.b16 %v1944
    %v2319 = vunpack.c.l.b16 %v1945
    %v2320 = vunpack.c.h.b16 %v1945
    %v2321 = vunpack.c.l.b16 %v1946
    %v2322 = vunpack.c.h.b16 %v1946
    %v2323 = vunpack.c.l.b16 %v1947
    %v2324 = vunpack.c.h.b16 %v1947
    %v2325 = vunpack.c.l.b16 %v1948
    %v2326 = vunpack.c.h.b16 %v1948
    %v2327 = vunpack.c.l.b16 %v1949
    %v2328 = vunpack.c.h.b16 %v1949
    %v2329 = vunpack.c.l.b16 %v1950
    %v2330 = vunpack.c.h.b16 %v1950
    %v2331 = vunpack.c.l.b16 %v1951
    %v2332 = vunpack.c.h.b16 %v1951
    %v2333 = vunpack.c.l.b16 %v1952
    %v2334 = vunpack.c.h.b16 %v1952
    %v2335 = vunpack.c.l.b16 %v1953
    %v2336 = vunpack.c.h.b16 %v1953
    %v2337 = vunpack.c.l.b16 %v1954
    %v2338 = vunpack.c.h.b16 %v1954
    %v2339 = vunpack.c.l.b16 %v1955
    %v2340 = vunpack.c.h.b16 %v1955
    %v2341 = vunpack.c.l.b16 %v1956
    %v2342 = vunpack.c.h.b16 %v1956
    %v2343 = vunpack.c.l.b16 %v1957
    %v2344 = vunpack.c.h.b16 %v1957
    %v2345 = vunpack.c.l.b16 %v1958
    %v2346 = vunpack.c.h.b16 %v1958
    %v2347 = vunpack.c.l.b16 %v1959
    %v2348 = vunpack.c.h.b16 %v1959
    %v2349 = vunpack.c.l.b16 %v1960
    %v2350 = vunpack.c.h.b16 %v1960
    %v2351 = vunpack.c.l.b16 %v1961
    %v2352 = vunpack.c.h.b16 %v1961
    %v2353 = vunpack.c.l.b16 %v1962
    %v2354 = vunpack.c.h.b16 %v1962
    %v2355 = vunpack.c.l.b16 %v1963
    %v2356 = vunpack.c.h.b16 %v1963
    %v2357 = vunpack.c.l.b16 %v1964
    %v2358 = vunpack.c.h.b16 %v1964
    %v2359 = vunpack.c.l.b16 %v1965
    %v2360 = vunpack.c.h.b16 %v1965
    %v2361 = vunpack.c.l.b16 %v1966
    %v2362 = vunpack.c.h.b16 %v1966
    %v2363 = vunpack.c.l.b16 %v1967
    %v2364 = vunpack.c.h.b16 %v1967
    %v2365 = vunpack.c.l.b16 %v1968
    %v2366 = vunpack.c.h.b16 %v1968
    %v2367 = vunpack.c.l.b16 %v1969
    %v2368 = vunpack.c.h.b16 %v1969
    %v2369 = vunpack.c.l.b16 %v1970
    %v2370 = vunpack.c.h.b16 %v1970
    %v2371 = vunpack.c.l.b16 %v1971
    %v2372 = vunpack.c.h.b16 %v1971
    %v2373 = vunpack.c.l.b16 %v1972
    %v2374 = vunpack.c.h.b16 %v1972
    %v2375 = vunpack.c.l.b16 %v1973
    %v2376 = vunpack.c.h.b16 %v1973
    %v2377 = vunpack.c.l.b16 %v1974
    %v2378 = vunpack.c.h.b16 %v1974
    %v2379 = vunpack.c.l.b16 %v1975
    %v2380 = vunpack.c.h.b16 %v1975
    %v2381 = vunpack.c.l.b16 %v1976
    %v2382 = vunpack.c.h.b16 %v1976
    %v2383 = vpack.c.b16 %v2131, %v2127
    %v2384 = vpack.c.b16 %v2132, %v2128
    %v2385 = vpack.c.b16 %v2133, %v2129
    %v2386 = vpack.c.b16 %v2134, %v2130
    %v2387 = vpack.c.b16 %v2139, %v2135
    %v2388 = vpack.c.b16 %v2140, %v2136
    %v2389 = vpack.c.b16 %v2141, %v2137
    %v2390 = vpack.c.b16 %v2142, %v2138
    %v2391 = vpack.c.b16 %v2147, %v2143
    %v2392 = vpack.c.b16 %v2148, %v2144
    %v2393 = vpack.c.b16 %v2149, %v2145
    %v2394 = vpack.c.b16 %v2150, %v2146
    %v2395 = vpack.c.b16 %v2155, %v2151
    %v2396 = vpack.c.b16 %v2156, %v2152
    %v2397 = vpack.c.b16 %v2157, %v2153
    %v2398 = vpack.c.b16 %v2158, %v2154
    %v2399 = vpack.c.b16 %v2163, %v2159
    %v2400 = vpack.c.b16 %v2164, %v2160
    %v2401 = vpack.c.b16 %v2165, %v2161
    %v2402 = vpack.c.b16 %v2166, %v2162
    %v2403 = vpack.c.b16 %v2171, %v2167
    %v2404 = vpack.c.b16 %v2172, %v2168
    %v2405 = vpack.c.b16 %v2173, %v2169
    %v2406 = vpack.c.b16 %v2174, %v2170
    %v2407 = vpack.c.b16 %v2179, %v2175
    %v2408 = vpack.c.b16 %v2180, %v2176
    %v2409 = vpack.c.b16 %v2181, %v2177
    %v2410 = vpack.c.b16 %v2182, %v2178
    %v2411 = vpack.c.b16 %v2187, %v2183
    %v2412 = vpack.c.b16 %v2188, %v2184
    %v2413 = vpack.c.b16 %v2189, %v2185
    %v2414 = vpack.c.b16 %v2190, %v2186
    %v2415 = vpack.c.b16 %v2195, %v2191
    %v2416 = vpack.c.b16 %v2196, %v2192
    %v2417 = vpack.c.b16 %v2197, %v2193
    %v2418 = vpack.c.b16 %v2198, %v2194
    %v2419 = vpack.c.b16 %v2203, %v2199
    %v2420 = vpack.c.b16 %v2204, %v2200
    %v2421 = vpack.c.b16 %v2205, %v2201
    %v2422 = vpack.c.b16 %v2206, %v2202
    %v2423 = vpack.c.b16 %v2211, %v2207
    %v2424 = vpack.c.b16 %v2212, %v2208
    %v2425 = vpack.c.b16 %v2213, %v2209
    %v2426 = vpack.c.b16 %v2214, %v2210
    %v2427 = vpack.c.b16 %v2219, %v2215
    %v2428 = vpack.c.b16 %v2220, %v2216
    %v2429 = vpack.c.b16 %v2221, %v2217
    %v2430 = vpack.c.b16 %v2222, %v2218
    %v2431 = vpack.c.b16 %v2227, %v2223
    %v2432 = vpack.c.b16 %v2228, %v2224
    %v2433 = vpack.c.b16 %v2229, %v2225
    %v2434 = vpack.c.b16 %v2230, %v2226
    %v2435 = vpack.c.b16 %v2235, %v2231
    %v2436 = vpack.c.b16 %v2236, %v2232
    %v2437 = vpack.c.b16 %v2237, %v2233
    %v2438 = vpack.c.b16 %v2238, %v2234
    %v2439 = vpack.c.b16 %v2243, %v2239
    %v2440 = vpack.c.b16 %v2244, %v2240
    %v2441 = vpack.c.b16 %v2245, %v2241
    %v2442 = vpack.c.b16 %v2246, %v2242
    %v2443 = vpack.c.b16 %v2251, %v2247
    %v2444 = vpack.c.b16 %v2252, %v2248
    %v2445 = vpack.c.b16 %v2253, %v2249
    %v2446 = vpack.c.b16 %v2254, %v2250
    %v2447 = vpack.c.b16 %v2259, %v2255
    %v2448 = vpack.c.b16 %v2260, %v2256
    %v2449 = vpack.c.b16 %v2261, %v2257
    %v2450 = vpack.c.b16 %v2262, %v2258
    %v2451 = vpack.c.b16 %v2267, %v2263
    %v2452 = vpack.c.b16 %v2268, %v2264
    %v2453 = vpack.c.b16 %v2269, %v2265
    %v2454 = vpack.c.b16 %v2270, %v2266
    %v2455 = vpack.c.b16 %v2275, %v2271
    %v2456 = vpack.c.b16 %v2276, %v2272
    %v2457 = vpack.c.b16 %v2277, %v2273
    %v2458 = vpack.c.b16 %v2278, %v2274
    %v2459 = vpack.c.b16 %v2283, %v2279
    %v2460 = vpack.c.b16 %v2284, %v2280
    %v2461 = vpack.c.b16 %v2285, %v2281
    %v2462 = vpack.c.b16 %v2286, %v2282
    %v2463 = vpack.c.b16 %v2291, %v2287
    %v2464 = vpack.c.b16 %v2292, %v2288
    %v2465 = vpack.c.b16 %v2293, %v2289
    %v2466 = vpack.c.b16 %v2294, %v2290
    %v2467 = vpack.c.b16 %v2299, %v2295
    %v2468 = vpack.c.b16 %v2300, %v2296
    %v2469 = vpack.c.b16 %v2301, %v2297
    %v2470 = vpack.c.b16 %v2302, %v2298
    %v2471 = vpack.c.b16 %v2307, %v2303
    %v2472 = vpack.c.b16 %v2308, %v2304
    %v2473 = vpack.c.b16 %v2309, %v2305
    %v2474 = vpack.c.b16 %v2310, %v2306
    %v2475 = vpack.c.b16 %v2315, %v2311
    %v2476 = vpack.c.b16 %v2316, %v2312
    %v2477 = vpack.c.b16 %v2317, %v2313
    %v2478 = vpack.c.b16 %v2318, %v2314
    %v2479 = vpack.c.b16 %v2323, %v2319
    %v2480 = vpack.c.b16 %v2324, %v2320
    %v2481 = vpack.c.b16 %v2325, %v2321
    %v2482 = vpack.c.b16 %v2326, %v2322
    %v2483 = vpack.c.b16 %v2331, %v2327
    %v2484 = vpack.c.b16 %v2332, %v2328
    %v2485 = vpack.c.b16 %v2333, %v2329
    %v2486 = vpack.c.b16 %v2334, %v2330
    %v2487 = vpack.c.b16 %v2339, %v2335
    %v2488 = vpack.c.b16 %v2340, %v2336
    %v2489 = vpack.c.b16 %v2341, %v2337
    %v2490 = vpack.c.b16 %v2342, %v2338
    %v2491 = vpack.c.b16 %v2347, %v2343
    %v2492 = vpack.c.b16 %v2348, %v2344
    %v2493 = vpack.c.b16 %v2349, %v2345
    %v2494 = vpack.c.b16 %v2350, %v2346
    %v2495 = vpack.c.b16 %v2355, %v2351
    %v2496 = vpack.c.b16 %v2356, %v2352
    %v2497 = vpack.c.b16 %v2357, %v2353
    %v2498 = vpack.c.b16 %v2358, %v2354
    %v2499 = vpack.c.b16 %v2363, %v2359
    %v2500 = vpack.c.b16 %v2364, %v2360
    %v2501 = vpack.c.b16 %v2365, %v2361
    %v2502 = vpack.c.b16 %v2366, %v2362
    %v2503 = vpack.c.b16 %v2371, %v2367
    %v2504 = vpack.c.b16 %v2372, %v2368
    %v2505 = vpack.c.b16 %v2373, %v2369
    %v2506 = vpack.c.b16 %v2374, %v2370
    %v2507 = vpack.c.b16 %v2379, %v2375
    %v2508 = vpack.c.b16 %v2380, %v2376
    %v2509 = vpack.c.b16 %v2381, %v2377
    %v2510 = vpack.c.b16 %v2382, %v2378
    %2639 = vmatprep.subr.bf16.mxu0 %v2384
    %2640 = vmatpush1.bf16.msra.mxu0 %v2383
    %2641 = vmatprep.subr.bf16.mxu0 %v2388
    %2642 = vmatpush1.bf16.msra.mxu0 %v2387
    %2643 = vmatprep.subr.bf16.mxu0 %v2392
    %2644 = vmatpush1.bf16.msra.mxu0 %v2391
    %2645 = vmatprep.subr.bf16.mxu0 %v2396
    %2646 = vmatpush1.bf16.msra.mxu0 %v2395
    %2647 = vmatprep.subr.bf16.mxu0 %v2400
    %2648 = vmatpush1.bf16.msra.mxu0 %v2399
    %2649 = vmatprep.subr.bf16.mxu0 %v2404
    %2650 = vmatpush1.bf16.msra.mxu0 %v2403
    %2651 = vmatprep.subr.bf16.mxu0 %v2408
    %2652 = vmatpush1.bf16.msra.mxu0 %v2407
    %2653 = vmatprep.subr.bf16.mxu0 %v2412
    %2654 = vmatpush1.bf16.msra.mxu0 %v2411
    %2655 = vmatprep.subr.bf16.mxu0 %v2416
    %2656 = vmatpush1.bf16.msra.mxu0 %v2415
    %2657 = vmatprep.subr.bf16.mxu0 %v2420
    %2658 = vmatpush1.bf16.msra.mxu0 %v2419
    %2659 = vmatprep.subr.bf16.mxu0 %v2424
    %2660 = vmatpush1.bf16.msra.mxu0 %v2423
    %2661 = vmatprep.subr.bf16.mxu0 %v2428
    %2662 = vmatpush1.bf16.msra.mxu0 %v2427
    %2663 = vmatprep.subr.bf16.mxu0 %v2432
    %2664 = vmatpush1.bf16.msra.mxu0 %v2431
    %2665 = vmatprep.subr.bf16.mxu0 %v2436
    %2666 = vmatpush1.bf16.msra.mxu0 %v2435
    %2667 = vmatprep.subr.bf16.mxu0 %v2440
    %2668 = vmatpush1.bf16.msra.mxu0 %v2439
    %2669 = vmatprep.subr.bf16.mxu0 %v2444
    %2670 = vmatpush1.bf16.msra.mxu0 %v2443
    %2671 = vmatprep.mubr.bf16.mxu0 %v1846
    %2672 = vmatmul.mubr.bf16.gmra.mrb[0].mxu0 %v1845
    %v2673 = vpop.f32.mrb[0].mxu0
    %v2674 = vadd.f32 %v1982, %v2673
    %v2675 = vpop.f32.mrb[0].mxu0
    %v2676 = vadd.f32 %v1986, %v2675
    %v2677 = vpop.f32.mrb[0].mxu0
    %v2678 = vpop.f32.mrb[0].mxu0
    %2679 = vdwg.mxu0
    %2680 = vmatprep.subr.bf16.mxu0 %v2448
    %2681 = vmatpush1.bf16.msra.mxu0 %v2447
    %2682 = vmatprep.subr.bf16.mxu0 %v2452
    %2683 = vmatpush1.bf16.msra.mxu0 %v2451
    %2684 = vmatprep.subr.bf16.mxu0 %v2456
    %2685 = vmatpush1.bf16.msra.mxu0 %v2455
    %2686 = vmatprep.subr.bf16.mxu0 %v2460
    %2687 = vmatpush1.bf16.msra.mxu0 %v2459
    %2688 = vmatprep.subr.bf16.mxu0 %v2464
    %2689 = vmatpush1.bf16.msra.mxu0 %v2463
    %2690 = vmatprep.subr.bf16.mxu0 %v2468
    %2691 = vmatpush1.bf16.msra.mxu0 %v2467
    %2692 = vmatprep.subr.bf16.mxu0 %v2472
    %2693 = vmatpush1.bf16.msra.mxu0 %v2471
    %2694 = vmatprep.subr.bf16.mxu0 %v2476
    %2695 = vmatpush1.bf16.msra.mxu0 %v2475
    %2696 = vmatprep.subr.bf16.mxu0 %v2480
    %2697 = vmatpush1.bf16.msra.mxu0 %v2479
    %2698 = vmatprep.subr.bf16.mxu0 %v2484
    %2699 = vmatpush1.bf16.msra.mxu0 %v2483
    %2700 = vmatprep.subr.bf16.mxu0 %v2488
    %2701 = vmatpush1.bf16.msra.mxu0 %v2487
    %2702 = vmatprep.subr.bf16.mxu0 %v2492
    %2703 = vmatpush1.bf16.msra.mxu0 %v2491
    %2704 = vmatprep.subr.bf16.mxu0 %v2496
    %2705 = vmatpush1.bf16.msra.mxu0 %v2495
    %2706 = vmatprep.subr.bf16.mxu0 %v2500
    %2707 = vmatpush1.bf16.msra.mxu0 %v2499
    %2708 = vmatprep.subr.bf16.mxu0 %v2504
    %2709 = vmatpush1.bf16.msra.mxu0 %v2503
    %2710 = vmatprep.subr.bf16.mxu0 %v2508
    %2711 = vmatpush1.bf16.msra.mxu0 %v2507
    %2712 = vmatprep.mubr.bf16.mxu0 %v1848
    %2713 = vmatmul.mubr.bf16.gmra.mrb[0].mxu0 %v1847
    %v2714 = vpop.f32.mrb[0].mxu0
    %v2715 = vadd.f32 %v2674, %v2714
    %v2716 = vpop.f32.mrb[0].mxu0
    %v2717 = vadd.f32 %v2676, %v2716
    %v2718 = vpop.f32.mrb[0].mxu0
    %v2719 = vpop.f32.mrb[0].mxu0
    %2720 = vdwg.mxu0
    %2721 = vmatprep.subr.bf16.mxu0 %v2386
    %2722 = vmatpush1.bf16.msra.mxu0 %v2385
    %2723 = vmatprep.subr.bf16.mxu0 %v2390
    %2724 = vmatpush1.bf16.msra.mxu0 %v2389
    %2725 = vmatprep.subr.bf16.mxu0 %v2394
    %2726 = vmatpush1.bf16.msra.mxu0 %v2393
    %2727 = vmatprep.subr.bf16.mxu0 %v2398
    %2728 = vmatpush1.bf16.msra.mxu0 %v2397
    %2729 = vmatprep.subr.bf16.mxu0 %v2402
    %2730 = vmatpush1.bf16.msra.mxu0 %v2401
    %2731 = vmatprep.subr.bf16.mxu0 %v2406
    %2732 = vmatpush1.bf16.msra.mxu0 %v2405
    %2733 = vmatprep.subr.bf16.mxu0 %v2410
    %2734 = vmatpush1.bf16.msra.mxu0 %v2409
    %2735 = vmatprep.subr.bf16.mxu0 %v2414
    %2736 = vmatpush1.bf16.msra.mxu0 %v2413
    %2737 = vmatprep.subr.bf16.mxu0 %v2418
    %2738 = vmatpush1.bf16.msra.mxu0 %v2417
    %2739 = vmatprep.subr.bf16.mxu0 %v2422
    %2740 = vmatpush1.bf16.msra.mxu0 %v2421
    %2741 = vmatprep.subr.bf16.mxu0 %v2426
    %2742 = vmatpush1.bf16.msra.mxu0 %v2425
    %2743 = vmatprep.subr.bf16.mxu0 %v2430
    %2744 = vmatpush1.bf16.msra.mxu0 %v2429
    %2745 = vmatprep.subr.bf16.mxu0 %v2434
    %2746 = vmatpush1.bf16.msra.mxu0 %v2433
    %2747 = vmatprep.subr.bf16.mxu0 %v2438
    %2748 = vmatpush1.bf16.msra.mxu0 %v2437
    %2749 = vmatprep.subr.bf16.mxu0 %v2442
    %2750 = vmatpush1.bf16.msra.mxu0 %v2441
    %2751 = vmatprep.subr.bf16.mxu0 %v2446
    %2752 = vmatpush1.bf16.msra.mxu0 %v2445
    %2753 = vmatprep.mubr.bf16.mxu0 %v1846
    %2754 = vmatmul.mubr.bf16.gmra.mrb[0].mxu0 %v1845
    %v2755 = vpop.f32.mrb[0].mxu0
    %v2756 = vadd.f32 %v1990, %v2755
    %v2757 = vpop.f32.mrb[0].mxu0
    %v2758 = vadd.f32 %v1994, %v2757
    %v2759 = vpop.f32.mrb[0].mxu0
    %v2760 = vpop.f32.mrb[0].mxu0
    %2761 = vdwg.mxu0
    %2762 = vmatprep.subr.bf16.mxu0 %v2450
    %2763 = vmatpush1.bf16.msra.mxu0 %v2449
    %2764 = vmatprep.subr.bf16.mxu0 %v2454
    %2765 = vmatpush1.bf16.msra.mxu0 %v2453
    %2766 = vmatprep.subr.bf16.mxu0 %v2458
    %2767 = vmatpush1.bf16.msra.mxu0 %v2457
    %2768 = vmatprep.subr.bf16.mxu0 %v2462
    %2769 = vmatpush1.bf16.msra.mxu0 %v2461
    %2770 = vmatprep.subr.bf16.mxu0 %v2466
    %2771 = vmatpush1.bf16.msra.mxu0 %v2465
    %2772 = vmatprep.subr.bf16.mxu0 %v2470
    %2773 = vmatpush1.bf16.msra.mxu0 %v2469
    %2774 = vmatprep.subr.bf16.mxu0 %v2474
    %2775 = vmatpush1.bf16.msra.mxu0 %v2473
    %2776 = vmatprep.subr.bf16.mxu0 %v2478
    %2777 = vmatpush1.bf16.msra.mxu0 %v2477
    %2778 = vmatprep.subr.bf16.mxu0 %v2482
    %2779 = vmatpush1.bf16.msra.mxu0 %v2481
    %2780 = vmatprep.subr.bf16.mxu0 %v2486
    %2781 = vmatpush1.bf16.msra.mxu0 %v2485
    %2782 = vmatprep.subr.bf16.mxu0 %v2490
    %2783 = vmatpush1.bf16.msra.mxu0 %v2489
    %2784 = vmatprep.subr.bf16.mxu0 %v2494
    %2785 = vmatpush1.bf16.msra.mxu0 %v2493
    %2786 = vmatprep.subr.bf16.mxu0 %v2498
    %2787 = vmatpush1.bf16.msra.mxu0 %v2497
    %2788 = vmatprep.subr.bf16.mxu0 %v2502
    %2789 = vmatpush1.bf16.msra.mxu0 %v2501
    %2790 = vmatprep.subr.bf16.mxu0 %v2506
    %2791 = vmatpush1.bf16.msra.mxu0 %v2505
    %2792 = vmatprep.subr.bf16.mxu0 %v2510
    %2793 = vmatpush1.bf16.msra.mxu0 %v2509
    %2794 = vmatprep.mubr.bf16.mxu0 %v1848
    %2795 = vmatmul.mubr.bf16.gmra.mrb[0].mxu0 %v1847
    %v2796 = vpop.f32.mrb[0].mxu0
    %v2797 = vadd.f32 %v2756, %v2796
    %v2798 = vpop.f32.mrb[0].mxu0
    %v2799 = vadd.f32 %v2758, %v2798
    %v2800 = vpop.f32.mrb[0].mxu0
    %v2801 = vpop.f32.mrb[0].mxu0
    %2802 = vdwg.mxu0
    %v2803 = vmul.f32 %v2715, 0.2
    %v2804 = vmul.f32 %v2717, 0.2
    %v2805 = vmul.f32 %v2797, 0.2
    %v2806 = vmul.f32 %v2799, 0.2
    %v2807 = vmax.f32 %v2715, %v2803
    %v2808 = vmax.f32 %v2717, %v2804
    %v2809 = vmax.f32 %v2797, %v2805
    %v2810 = vmax.f32 %v2799, %v2806
    %v2811 = vpack.c.bf16 %v2807, %v2807
    %v2812 = vpack.c.bf16 %v2808, %v2808
    %v2813 = vpack.c.bf16 %v2809, %v2809
    %v2814 = vpack.c.bf16 %v2810, %v2810
    %v2815 = vld [vmem:[#allocation9] sm:$0xf]
    %v2816 = vld [vmem:[#allocation9 + $0x4] sm:$0xf]
    %v2817 = vld [vmem:[#allocation9 + $0x8] sm:$0xf]
    %v2818 = vld [vmem:[#allocation9 + $0xc] sm:$0xf]
    %v2819 = vld [vmem:[#allocation9 + $0x10] sm:$0xf]
    %v2820 = vld [vmem:[#allocation9 + $0x14] sm:$0xf]
    %v2821 = vld [vmem:[#allocation9 + $0x18] sm:$0xf]
    %v2822 = vld [vmem:[#allocation9 + $0x1c] sm:$0xf]
    %v2823 = vld [vmem:[#allocation9 + $0x20] sm:$0xf]
    %v2824 = vld [vmem:[#allocation9 + $0x24] sm:$0xf]
    %v2825 = vld [vmem:[#allocation9 + $0x28] sm:$0xf]
    %v2826 = vld [vmem:[#allocation9 + $0x2c] sm:$0xf]
    %v2827 = vld [vmem:[#allocation9 + $0x30] sm:$0xf]
    %v2828 = vld [vmem:[#allocation9 + $0x34] sm:$0xf]
    %v2829 = vld [vmem:[#allocation9 + $0x38] sm:$0xf]
    %v2830 = vld [vmem:[#allocation9 + $0x3c] sm:$0xf]
    %v2831 = vld [vmem:[#allocation9 + $0x40] sm:$0xf]
    %v2832 = vld [vmem:[#allocation9 + $0x44] sm:$0xf]
    %v2833 = vld [vmem:[#allocation9 + $0x48] sm:$0xf]
    %v2834 = vld [vmem:[#allocation9 + $0x4c] sm:$0xf]
    %v2835 = vld [vmem:[#allocation9 + $0x50] sm:$0xf]
    %v2836 = vld [vmem:[#allocation9 + $0x54] sm:$0xf]
    %v2837 = vld [vmem:[#allocation9 + $0x58] sm:$0xf]
    %v2838 = vld [vmem:[#allocation9 + $0x5c] sm:$0xf]
    %v2839 = vld [vmem:[#allocation9 + $0x60] sm:$0xf]
    %v2840 = vld [vmem:[#allocation9 + $0x64] sm:$0xf]
    %v2841 = vld [vmem:[#allocation9 + $0x68] sm:$0xf]
    %v2842 = vld [vmem:[#allocation9 + $0x6c] sm:$0xf]
    %v2843 = vld [vmem:[#allocation9 + $0x70] sm:$0xf]
    %v2844 = vld [vmem:[#allocation9 + $0x74] sm:$0xf]
    %v2845 = vld [vmem:[#allocation9 + $0x78] sm:$0xf]
    %v2846 = vld [vmem:[#allocation9 + $0x7c] sm:$0xf]
    %v2847 = vld [vmem:[#allocation9 + $0x80] sm:$0xf]
    %v2848 = vld [vmem:[#allocation9 + $0x84] sm:$0xf]
    %v2849 = vld [vmem:[#allocation9 + $0x88] sm:$0xf]
    %v2850 = vld [vmem:[#allocation9 + $0x8c] sm:$0xf]
    %v2851 = vld [vmem:[#allocation9 + $0x90] sm:$0xf]
    %v2852 = vld [vmem:[#allocation9 + $0x94] sm:$0xf]
    %v2853 = vld [vmem:[#allocation9 + $0x98] sm:$0xf]
    %v2854 = vld [vmem:[#allocation9 + $0x9c] sm:$0xf]
    %v2855 = vld [vmem:[#allocation9 + $0xa0] sm:$0xf]
    %v2856 = vld [vmem:[#allocation9 + $0xa4] sm:$0xf]
    %v2857 = vld [vmem:[#allocation9 + $0xa8] sm:$0xf]
    %v2858 = vld [vmem:[#allocation9 + $0xac] sm:$0xf]
    %v2859 = vld [vmem:[#allocation9 + $0xb0] sm:$0xf]
    %v2860 = vld [vmem:[#allocation9 + $0xb4] sm:$0xf]
    %v2861 = vld [vmem:[#allocation9 + $0xb8] sm:$0xf]
    %v2862 = vld [vmem:[#allocation9 + $0xbc] sm:$0xf]
    %v2863 = vld [vmem:[#allocation9 + $0xc0] sm:$0xf]
    %v2864 = vld [vmem:[#allocation9 + $0xc4] sm:$0xf]
    %v2865 = vld [vmem:[#allocation9 + $0xc8] sm:$0xf]
    %v2866 = vld [vmem:[#allocation9 + $0xcc] sm:$0xf]
    %v2867 = vld [vmem:[#allocation9 + $0xd0] sm:$0xf]
    %v2868 = vld [vmem:[#allocation9 + $0xd4] sm:$0xf]
    %v2869 = vld [vmem:[#allocation9 + $0xd8] sm:$0xf]
    %v2870 = vld [vmem:[#allocation9 + $0xdc] sm:$0xf]
    %v2871 = vld [vmem:[#allocation9 + $0xe0] sm:$0xf]
    %v2872 = vld [vmem:[#allocation9 + $0xe4] sm:$0xf]
    %v2873 = vld [vmem:[#allocation9 + $0xe8] sm:$0xf]
    %v2874 = vld [vmem:[#allocation9 + $0xec] sm:$0xf]
    %v2875 = vld [vmem:[#allocation9 + $0xf0] sm:$0xf]
    %v2876 = vld [vmem:[#allocation9 + $0xf4] sm:$0xf]
    %v2877 = vld [vmem:[#allocation9 + $0xf8] sm:$0xf]
    %v2878 = vld [vmem:[#allocation9 + $0xfc] sm:$0xf]
    %v2879 = vld [vmem:[%s11] sm:$0x1]
    %v2881 = vlaneseq
    %v2882 = vshrl.u32 %v2881, 7
    %v2883 = vsub.s32 0, %v2882
    %v2884 = vrot.slane %v2879, %v2883
    %v2950 = vunpack.c.l.b16 %v2815
    %v2951 = vunpack.c.l.b16 %v2816
    %v2952 = vunpack.c.l.b16 %v2817
    %v2953 = vunpack.c.l.b16 %v2818
    %v2954 = vunpack.c.l.b16 %v2819
    %v2955 = vunpack.c.l.b16 %v2820
    %v2956 = vunpack.c.l.b16 %v2821
    %v2957 = vunpack.c.l.b16 %v2822
    %v2958 = vunpack.c.l.b16 %v2823
    %v2959 = vunpack.c.l.b16 %v2824
    %v2960 = vunpack.c.l.b16 %v2825
    %v2961 = vunpack.c.l.b16 %v2826
    %v2962 = vunpack.c.l.b16 %v2827
    %v2963 = vunpack.c.l.b16 %v2828
    %v2964 = vunpack.c.l.b16 %v2829
    %v2965 = vunpack.c.l.b16 %v2830
    %v2966 = vunpack.c.l.b16 %v2831
    %v2967 = vunpack.c.l.b16 %v2832
    %v2968 = vunpack.c.l.b16 %v2833
    %v2969 = vunpack.c.l.b16 %v2834
    %v2970 = vunpack.c.l.b16 %v2835
    %v2971 = vunpack.c.l.b16 %v2836
    %v2972 = vunpack.c.l.b16 %v2837
    %v2973 = vunpack.c.l.b16 %v2838
    %v2974 = vunpack.c.l.b16 %v2839
    %v2975 = vunpack.c.l.b16 %v2840
    %v2976 = vunpack.c.l.b16 %v2841
    %v2977 = vunpack.c.l.b16 %v2842
    %v2978 = vunpack.c.l.b16 %v2843
    %v2979 = vunpack.c.l.b16 %v2844
    %v2980 = vunpack.c.l.b16 %v2845
    %v2981 = vunpack.c.l.b16 %v2846
    %v2982 = vunpack.c.l.b16 %v2847
    %v2983 = vunpack.c.l.b16 %v2848
    %v2984 = vunpack.c.l.b16 %v2849
    %v2985 = vunpack.c.l.b16 %v2850
    %v2986 = vunpack.c.l.b16 %v2851
    %v2987 = vunpack.c.l.b16 %v2852
    %v2988 = vunpack.c.l.b16 %v2853
    %v2989 = vunpack.c.l.b16 %v2854
    %v2990 = vunpack.c.l.b16 %v2855
    %v2991 = vunpack.c.l.b16 %v2856
    %v2992 = vunpack.c.l.b16 %v2857
    %v2993 = vunpack.c.l.b16 %v2858
    %v2994 = vunpack.c.l.b16 %v2859
    %v2995 = vunpack.c.l.b16 %v2860
    %v2996 = vunpack.c.l.b16 %v2861
    %v2997 = vunpack.c.l.b16 %v2862
    %v2998 = vunpack.c.l.b16 %v2863
    %v2999 = vunpack.c.l.b16 %v2864
    %v3000 = vunpack.c.l.b16 %v2865
    %v3001 = vunpack.c.l.b16 %v2866
    %v3002 = vunpack.c.l.b16 %v2867
    %v3003 = vunpack.c.l.b16 %v2868
    %v3004 = vunpack.c.l.b16 %v2869
    %v3005 = vunpack.c.l.b16 %v2870
    %v3006 = vunpack.c.l.b16 %v2871
    %v3007 = vunpack.c.l.b16 %v2872
    %v3008 = vunpack.c.l.b16 %v2873
    %v3009 = vunpack.c.l.b16 %v2874
    %v3010 = vunpack.c.l.b16 %v2875
    %v3011 = vunpack.c.l.b16 %v2876
    %v3012 = vunpack.c.l.b16 %v2877
    %v3013 = vunpack.c.l.b16 %v2878
    %v3014 = vpack.c.b16 %v2951, %v2950
    %v3015 = vpack.c.b16 %v2953, %v2952
    %v3016 = vpack.c.b16 %v2955, %v2954
    %v3017 = vpack.c.b16 %v2957, %v2956
    %v3018 = vpack.c.b16 %v2959, %v2958
    %v3019 = vpack.c.b16 %v2961, %v2960
    %v3020 = vpack.c.b16 %v2963, %v2962
    %v3021 = vpack.c.b16 %v2965, %v2964
    %v3022 = vpack.c.b16 %v2967, %v2966
    %v3023 = vpack.c.b16 %v2969, %v2968
    %v3024 = vpack.c.b16 %v2971, %v2970
    %v3025 = vpack.c.b16 %v2973, %v2972
    %v3026 = vpack.c.b16 %v2975, %v2974
    %v3027 = vpack.c.b16 %v2977, %v2976
    %v3028 = vpack.c.b16 %v2979, %v2978
    %v3029 = vpack.c.b16 %v2981, %v2980
    %v3030 = vpack.c.b16 %v2983, %v2982
    %v3031 = vpack.c.b16 %v2985, %v2984
    %v3032 = vpack.c.b16 %v2987, %v2986
    %v3033 = vpack.c.b16 %v2989, %v2988
    %v3034 = vpack.c.b16 %v2991, %v2990
    %v3035 = vpack.c.b16 %v2993, %v2992
    %v3036 = vpack.c.b16 %v2995, %v2994
    %v3037 = vpack.c.b16 %v2997, %v2996
    %v3038 = vpack.c.b16 %v2999, %v2998
    %v3039 = vpack.c.b16 %v3001, %v3000
    %v3040 = vpack.c.b16 %v3003, %v3002
    %v3041 = vpack.c.b16 %v3005, %v3004
    %v3042 = vpack.c.b16 %v3007, %v3006
    %v3043 = vpack.c.b16 %v3009, %v3008
    %v3044 = vpack.c.b16 %v3011, %v3010
    %v3045 = vpack.c.b16 %v3013, %v3012
    %3078 = vmatprep.subr.bf16.mxu0 0
    %3079 = vmatpush1.bf16.msra.mxu0 %v3014
    %3080 = vmatprep.subr.bf16.mxu0 0
    %3081 = vmatpush1.bf16.msra.mxu0 %v3015
    %3082 = vmatprep.subr.bf16.mxu0 0
    %3083 = vmatpush1.bf16.msra.mxu0 %v3016
    %3084 = vmatprep.subr.bf16.mxu0 0
    %3085 = vmatpush1.bf16.msra.mxu0 %v3017
    %3086 = vmatprep.subr.bf16.mxu0 0
    %3087 = vmatpush1.bf16.msra.mxu0 %v3018
    %3088 = vmatprep.subr.bf16.mxu0 0
    %3089 = vmatpush1.bf16.msra.mxu0 %v3019
    %3090 = vmatprep.subr.bf16.mxu0 0
    %3091 = vmatpush1.bf16.msra.mxu0 %v3020
    %3092 = vmatprep.subr.bf16.mxu0 0
    %3093 = vmatpush1.bf16.msra.mxu0 %v3021
    %3094 = vmatprep.subr.bf16.mxu0 0
    %3095 = vmatpush1.bf16.msra.mxu0 %v3022
    %3096 = vmatprep.subr.bf16.mxu0 0
    %3097 = vmatpush1.bf16.msra.mxu0 %v3023
    %3098 = vmatprep.subr.bf16.mxu0 0
    %3099 = vmatpush1.bf16.msra.mxu0 %v3024
    %3100 = vmatprep.subr.bf16.mxu0 0
    %3101 = vmatpush1.bf16.msra.mxu0 %v3025
    %3102 = vmatprep.subr.bf16.mxu0 0
    %3103 = vmatpush1.bf16.msra.mxu0 %v3026
    %3104 = vmatprep.subr.bf16.mxu0 0
    %3105 = vmatpush1.bf16.msra.mxu0 %v3027
    %3106 = vmatprep.subr.bf16.mxu0 0
    %3107 = vmatpush1.bf16.msra.mxu0 %v3028
    %3108 = vmatprep.subr.bf16.mxu0 0
    %3109 = vmatpush1.bf16.msra.mxu0 %v3029
    %3110 = vmatprep.mubr.bf16.mxu0 %v2812
    %3111 = vmatmul.mubr.bf16.gmra.mrb[0].mxu0 %v2811
    %v3112 = vpop.f32.mrb[0].mxu0
    %v3113 = vadd.f32 %v2884, %v3112
    %v3114 = vpop.f32.mrb[0].mxu0
    %v3115 = vpop.f32.mrb[0].mxu0
    %v3116 = vpop.f32.mrb[0].mxu0
    %3117 = vdwg.mxu0
    %3118 = vmatprep.subr.bf16.mxu0 0
    %3119 = vmatpush1.bf16.msra.mxu0 %v3030
    %3120 = vmatprep.subr.bf16.mxu0 0
    %3121 = vmatpush1.bf16.msra.mxu0 %v3031
    %3122 = vmatprep.subr.bf16.mxu0 0
    %3123 = vmatpush1.bf16.msra.mxu0 %v3032
    %3124 = vmatprep.subr.bf16.mxu0 0
    %3125 = vmatpush1.bf16.msra.mxu0 %v3033
    %3126 = vmatprep.subr.bf16.mxu0 0
    %3127 = vmatpush1.bf16.msra.mxu0 %v3034
    %3128 = vmatprep.subr.bf16.mxu0 0
    %3129 = vmatpush1.bf16.msra.mxu0 %v3035
    %3130 = vmatprep.subr.bf16.mxu0 0
    %3131 = vmatpush1.bf16.msra.mxu0 %v3036
    %3132 = vmatprep.subr.bf16.mxu0 0
    %3133 = vmatpush1.bf16.msra.mxu0 %v3037
    %3134 = vmatprep.subr.bf16.mxu0 0
    %3135 = vmatpush1.bf16.msra.mxu0 %v3038
    %3136 = vmatprep.subr.bf16.mxu0 0
    %3137 = vmatpush1.bf16.msra.mxu0 %v3039
    %3138 = vmatprep.subr.bf16.mxu0 0
    %3139 = vmatpush1.bf16.msra.mxu0 %v3040
    %3140 = vmatprep.subr.bf16.mxu0 0
    %3141 = vmatpush1.bf16.msra.mxu0 %v3041
    %3142 = vmatprep.subr.bf16.mxu0 0
    %3143 = vmatpush1.bf16.msra.mxu0 %v3042
    %3144 = vmatprep.subr.bf16.mxu0 0
    %3145 = vmatpush1.bf16.msra.mxu0 %v3043
    %3146 = vmatprep.subr.bf16.mxu0 0
    %3147 = vmatpush1.bf16.msra.mxu0 %v3044
    %3148 = vmatprep.subr.bf16.mxu0 0
    %3149 = vmatpush1.bf16.msra.mxu0 %v3045
    %3150 = vmatprep.mubr.bf16.mxu0 %v2814
    %3151 = vmatmul.mubr.bf16.gmra.mrb[0].mxu0 %v2813
    %v3152 = vpop.f32.mrb[0].mxu0
    %v3153 = vadd.f32 %v3113, %v3152
    %v3154 = vpop.f32.mrb[0].mxu0
    %v3155 = vpop.f32.mrb[0].mxu0
    %v3156 = vpop.f32.mrb[0].mxu0
    %3157 = vdwg.mxu0
    %v3158 = vxor.u32 %v3153, 2147483648
    %v3159 = vmul.f32 %v3158, 1.442695
    %v3160 = vpow.pop %v3159
    %v3161 = vadd.f32 %v3160, 1.0
    %v3162 = vrcp.pop %v3161
    %v3163 = vmul.f32 1.0, %v3162
    %v3164 = vpack.c.bf16 %v3163, %v3163
    %3165 = vst [vmem:[%s12] sm:$0xf] %v3164
    // Predicated region
    $region62: #{discriminator_forward.1} parent=1 // pred_check
      _
    $region63: #{discriminator_forward.1} parent=1 // pred_check_branch
      %3167 = sbr.rel (0) target = $region65
    $region64: #{discriminator_forward.1} parent=1 // pred_region
      _
    $region65: #{discriminator_forward.1} parent=1 // pred_fallthru
      _
    // Predicated region
    $region66: #{discriminator_forward.1} parent=1 // pred_check
      _
    $region67: #{discriminator_forward.1} parent=1 // pred_check_branch
      %3169 = sbr.rel (0) target = $region69
    $region68: #{discriminator_forward.1} parent=1 // pred_region
      _
    $region69: #{discriminator_forward.1} parent=1 // pred_fallthru
      _
    %3170 = vsyncpa [#allocation5], 1
    %3171 = vsyncpa [#allocation7], 1
    %3172 = vsyncpa [#allocation10], 1

</llo_original>
